<compile_context>
chip_gen: v7x
topology: tpu7x:2x2x1
jax: 0.10.0
libtpu: 0.0.40
codegen_flags: <defaults>
</compile_context>

<pallas_src>
import functools

import jax
import jax.numpy as jnp
from jax.experimental import pallas as pl
from jax.experimental.pallas import tpu as pltpu

SEQ_LEN = 4          # input length implied by fc1 in_features = 128 * 2
SEQ_PAD = 8          # x feature rows padded to a full sublane group
C1, C2 = 64, 128     # conv1 / conv2 output channels
T1 = SEQ_LEN - 1     # conv1 output length = 3
T2 = SEQ_LEN - 2     # conv2 output length = 2
HID = 100            # fc1 hidden size
HID_PAD = 128        # padded hidden size (clean sublane tiles)


def _round_up(n, m):
    return ((n + m - 1) // m) * m


def _mxu_is_128():
    """True on 128x128-MXU generations (<= v5); v6e/v7x have 256x256 MXUs."""
    try:
        kind = jax.devices()[0].device_kind.lower()
    except Exception:
        return False
    return any(v in kind for v in ("v2", "v3", "v4", "v5"))


def cnn_kernel(split_conv2,
               x_ref,                      # (SEQ_PAD, TB)  feature-major, batch on lanes
               w1s_ref, b1s_ref,           # (192, 8), (192, 1)
               w2s_ref, b2s_ref,           # (256, 192), (256, 1)
               fw1_ref, fb1_ref,           # (128, 256), (128, 1)
               fw2_ref, fb2_ref,           # (128, 1), (1, 1)
               out_ref):                   # (1, TB)
    # --- conv1 + ReLU, all 3 output time steps in ONE stacked matmul:
    #     h1s[64*t + c, b] = relu(w1[c,0,0]*x[t,b] + w1[c,0,1]*x[t+1,b] + b1[c])
    h1s = jnp.dot(w1s_ref[...], x_ref[...], preferred_element_type=jnp.float32)
    h1s = jnp.maximum(h1s + b1s_ref[...], 0.0)                     # (192, TB)

    if split_conv2:
        # 128x128-MXU chips (<= v5): two exactly-full (128,128)@(128,TB)
        # matmuls per layer; no concats, no misaligned lane slices, and the
        # same (128,128) conv2 weight tile is reused for both time steps.
        w2c = w2s_ref[0:C2, 0:2 * C1]                              # (128, 128)
        b2c = b2s_ref[0:C2, :]
        h2a = jnp.maximum(jnp.dot(w2c, h1s[0:2 * C1, :],
                                  preferred_element_type=jnp.float32) + b2c,
                          0.0)                                     # t = 0
        h2b = jnp.maximum(jnp.dot(w2c, h1s[C1:3 * C1, :],
                                  preferred_element_type=jnp.float32) + b2c,
                          0.0)                                     # t = 1
        z = (jnp.dot(fw1_ref[:, 0:C2], h2a,
                     preferred_element_type=jnp.float32)
             + jnp.dot(fw1_ref[:, C2:2 * C2], h2b,
                       preferred_element_type=jnp.float32))        # (128, TB)
    else:
        # 256x256-MXU chips (v6e / v7x): one full-depth block matmul whose
        # output rows are already in PyTorch flatten order
        # (rows 0..127 = time step 0 channels, rows 128..255 = time step 1),
        # so the flatten is free and fc1 is a single K=256 matmul.
        h2s = jnp.dot(w2s_ref[...], h1s, preferred_element_type=jnp.float32)
        h2s = jnp.maximum(h2s + b2s_ref[...], 0.0)                 # (256, TB)
        z = jnp.dot(fw1_ref[...], h2s,
                    preferred_element_type=jnp.float32)            # (128, TB)

    # fc1 bias + ReLU (HID padded 100 -> 128; padded rows stay exactly zero).
    z = jnp.maximum(z + fb1_ref[...], 0.0)

    # Dropout(p=0.5) is identity in eval mode.
    # fc2 (out_features=1): VPU multiply + sublane reduce instead of an M=1
    # MXU matmul; the result is a lane-dense (1, TB) row store.
    out_ref[...] = (jnp.sum(z * fw2_ref[...], axis=0, keepdims=True)
                    + fb2_ref[...])


def _pick_tile(batch, block_b):
    """Lane tile: multiple of 128, capped so the grid keeps >= 2 steps when
    the batch allows it (v7x dual-TensorCore sharding)."""
    blk = max(128, _round_up(block_b, 128))
    half = max(128, _round_up(-(-batch // 2), 128))   # ceil(batch/2), 128-aligned
    return min(blk, half)


def cnn_forward(x, params, *, block_b=1024, split_conv2=None):
    """x: (B, 1, SEQ_LEN) float32 NCW (PyTorch Conv1d layout). Returns (B, 1)."""
    w1, b1, w2, b2, fw1, fb1, fw2, fb2 = params
    B = x.shape[0]
    assert x.shape[1] == 1 and x.shape[2] == SEQ_LEN
    if split_conv2 is None:
        split_conv2 = _mxu_is_128()

    tb = _pick_tile(B, block_b)
    b_pad = _round_up(B, tb)

    # Feature-major activations: batch on the 128-lane axis everywhere.
    # (One extra HBM pass over x; the kernel is heavily compute-bound, so
    # this is negligible next to the conv2/fc1 matmuls.)
    xt = x[:, 0, :].astype(jnp.float32).T                          # (4, B)
    xt = jnp.pad(xt, ((0, SEQ_PAD - SEQ_LEN), (0, b_pad - B)))     # (8, B_pad)

    # ---- one-time weight re-stacking (plain XLA, outside the kernel) ----
    # conv1 as a stacked matmul: row 64*t + c holds (w1[c,0,0], w1[c,0,1]) at
    # input positions t, t+1; zero elsewhere (incl. padded rows 4..7).
    w1s = jnp.zeros((T1 * C1, SEQ_PAD), jnp.float32)
    for t in range(T1):
        w1s = w1s.at[t * C1:(t + 1) * C1, t].set(w1[:, 0, 0])
        w1s = w1s.at[t * C1:(t + 1) * C1, t + 1].set(w1[:, 0, 1])
    b1s = jnp.tile(b1.reshape(C1, 1), (T1, 1))                     # (192, 1)

    # conv2 as a block matrix producing both output time steps stacked on M
    # (already in PyTorch flatten order): rows 0..127 use taps K[0:128] (t=0),
    # rows 128..255 use taps K[64:192] (t=1).
    w2s = jnp.zeros((T2 * C2, T1 * C1), jnp.float32)
    w2s = w2s.at[0:C2, 0:C1].set(w2[:, :, 0])
    w2s = w2s.at[0:C2, C1:2 * C1].set(w2[:, :, 1])
    w2s = w2s.at[C2:2 * C2, C1:2 * C1].set(w2[:, :, 0])
    w2s = w2s.at[C2:2 * C2, 2 * C1:3 * C1].set(w2[:, :, 1])
    b2s = jnp.tile(b2.reshape(C2, 1), (T2, 1))                     # (256, 1)

    # fc1: de-interleave PyTorch flatten columns (flat index = 2*c + t) into
    # the stacked-row layout above, and pad HID 100 -> 128.
    fw1s = jnp.zeros((HID_PAD, T2 * C2), jnp.float32)
    fw1s = fw1s.at[:HID, 0:C2].set(fw1[:, 0::2])
    fw1s = fw1s.at[:HID, C2:2 * C2].set(fw1[:, 1::2])
    fb1s = jnp.zeros((HID_PAD, 1), jnp.float32).at[:HID, 0].set(fb1)
    fw2c = jnp.zeros((HID_PAD, 1), jnp.float32).at[:HID, 0].set(fw2[0, :])
    fb2r = fb2.reshape(1, 1)

    const = lambda i: (0, 0)          # weights: DMA'd once, resident thereafter
    out = pl.pallas_call(
        functools.partial(cnn_kernel, split_conv2),
        out_shape=jax.ShapeDtypeStruct((1, b_pad), jnp.float32),
        grid=(b_pad // tb,),
        in_specs=[
            pl.BlockSpec((SEQ_PAD, tb), lambda i: (0, i)),         # only x moves
            pl.BlockSpec((T1 * C1, SEQ_PAD), const),
            pl.BlockSpec((T1 * C1, 1), const),
            pl.BlockSpec((T2 * C2, T1 * C1), const),
            pl.BlockSpec((T2 * C2, 1), const),
            pl.BlockSpec((HID_PAD, T2 * C2), const),
            pl.BlockSpec((HID_PAD, 1), const),
            pl.BlockSpec((HID_PAD, 1), const),
            pl.BlockSpec((1, 1), const),
        ],
        out_specs=pl.BlockSpec((1, tb), lambda i: (0, i)),         # lane-dense row
        compiler_params=pltpu.CompilerParams(
            dimension_semantics=("parallel",),
            vmem_limit_bytes=32 * 1024 * 1024),
    )(xt, w1s, b1s, w2s, b2s, fw1s, fb1s, fw2c, fb2r)

    return out[0, :B].reshape(B, 1)


def reference_forward(x, params):
    """Pure-JAX reference replicating the PyTorch forward (eval mode)."""
    w1, b1, w2, b2, fw1, fb1, fw2, fb2 = params
    dn = ("NCH", "OIH", "NCH")
    h1 = jax.lax.conv_general_dilated(x, w1, (1,), "VALID",
                                      dimension_numbers=dn) + b1[None, :, None]
    h1 = jnp.maximum(h1, 0.0)
    h2 = jax.lax.conv_general_dilated(h1, w2, (1,), "VALID",
                                      dimension_numbers=dn) + b2[None, :, None]
    h2 = jnp.maximum(h2, 0.0)
    flat = h2.reshape(h2.shape[0], -1)          # PyTorch nn.Flatten order
    z = jnp.maximum(flat @ fw1.T + fb1, 0.0)
    return z @ fw2.T + fb2


def init_params(key):
    """Deterministic PyTorch-style uniform(-1/sqrt(fan_in), 1/sqrt(fan_in))."""
    ks = jax.random.split(key, 8)

    def u(k, shape, fan_in):
        bound = 1.0 / (fan_in ** 0.5)
        return jax.random.uniform(k, shape, jnp.float32, -bound, bound)

    w1 = u(ks[0], (C1, 1, 2), 1 * 2)
    b1 = u(ks[1], (C1,), 1 * 2)
    w2 = u(ks[2], (C2, C1, 2), C1 * 2)
    b2 = u(ks[3], (C2,), C1 * 2)
    fw1 = u(ks[4], (HID, C2 * 2), C2 * 2)
    fb1 = u(ks[5], (HID,), C2 * 2)
    fw2 = u(ks[6], (1, HID), HID)
    fb2 = u(ks[7], (1,), HID)
    return (w1, b1, w2, b2, fw1, fb1, fw2, fb2)


if __name__ == "__main__":
    root = jax.random.PRNGKey(0)
    k_params, k_x = jax.random.split(root)
    params = init_params(k_params)

    # Small smoke test (B=2) using the auto-detected conv2 path for this chip.
    B = 2
    x = jax.random.normal(k_x, (B, 1, SEQ_LEN), jnp.float32)
    out = jax.block_until_ready(cnn_forward(x, params))
    ref = jax.block_until_ready(reference_forward(x, params))
    assert out.shape == (B, 1), out.shape
    assert jnp.allclose(out, ref, atol=1e-4, rtol=1e-4), (out, ref)

    # Multi-step grid + ragged-batch padding; exercise BOTH conv2 code paths
    # (stacked 256x192 block matmul and the split 128x128 variant).
    B2 = 300
    x2 = jax.random.normal(jax.random.PRNGKey(1), (B2, 1, SEQ_LEN), jnp.float32)
    ref2 = jax.block_until_ready(reference_forward(x2, params))
    for split in (False, True):
        out2 = jax.block_until_ready(
            cnn_forward(x2, params, block_b=256, split_conv2=split))
        assert out2.shape == (B2, 1), out2.shape
        assert jnp.allclose(out2, ref2, atol=1e-4, rtol=1e-4)

    print("KERNEL_OK")
</pallas_src>

<mosaic_0001>
module attributes {stable_mosaic.version = 11 : i64} {
  func.func @cnn_kernel(%arg0: i32, %arg1: memref<8x128xf32, #tpu.memory_space<vmem>>, %arg2: memref<192x8xf32, #tpu.memory_space<vmem>>, %arg3: memref<192x1xf32, #tpu.memory_space<vmem>>, %arg4: memref<256x192xf32, #tpu.memory_space<vmem>>, %arg5: memref<256x1xf32, #tpu.memory_space<vmem>>, %arg6: memref<128x256xf32, #tpu.memory_space<vmem>>, %arg7: memref<128x1xf32, #tpu.memory_space<vmem>>, %arg8: memref<128x1xf32, #tpu.memory_space<vmem>>, %arg9: memref<1x1xf32, #tpu.memory_space<vmem>>, %arg10: memref<1x128xf32, #tpu.memory_space<vmem>>) attributes {dimension_semantics = [#tpu.dimension_semantics<parallel>], iteration_bounds = array<i64: 1>, scalar_prefetch = 0 : i64, scratch_operands = 0 : i64, tpu.core_type = #tpu.core_type<tc>, window_params = [{transform_indices = @transform_0, window_bounds = array<i64: 8, 128>}, {pipeline_mode = #tpu.pipeline_mode<synchronous>, transform_indices = @transform_1, window_bounds = array<i64: 192, 8>}, {pipeline_mode = #tpu.pipeline_mode<synchronous>, transform_indices = @transform_2, window_bounds = array<i64: 192, 1>}, {pipeline_mode = #tpu.pipeline_mode<synchronous>, transform_indices = @transform_3, window_bounds = array<i64: 256, 192>}, {pipeline_mode = #tpu.pipeline_mode<synchronous>, transform_indices = @transform_4, window_bounds = array<i64: 256, 1>}, {pipeline_mode = #tpu.pipeline_mode<synchronous>, transform_indices = @transform_5, window_bounds = array<i64: 128, 256>}, {pipeline_mode = #tpu.pipeline_mode<synchronous>, transform_indices = @transform_6, window_bounds = array<i64: 128, 1>}, {pipeline_mode = #tpu.pipeline_mode<synchronous>, transform_indices = @transform_7, window_bounds = array<i64: 128, 1>}, {pipeline_mode = #tpu.pipeline_mode<synchronous>, transform_indices = @transform_8, window_bounds = array<i64: 1, 1>}, {transform_indices = @transform_9, window_bounds = array<i64: 1, 128>}]} {
    %c0 = arith.constant 0 : index
    %c0_0 = arith.constant 0 : index
    %0 = vector.load %arg2[%c0, %c0_0] : memref<192x8xf32, #tpu.memory_space<vmem>>, vector<192x8xf32>
    %c0_1 = arith.constant 0 : index
    %c0_2 = arith.constant 0 : index
    %1 = vector.load %arg1[%c0_1, %c0_2] : memref<8x128xf32, #tpu.memory_space<vmem>>, vector<8x128xf32>
    %cst = arith.constant dense<0.000000e+00> : vector<192x128xf32>
    %2 = tpu.matmul %0, %1, %cst {dimension_numbers = #tpu.dot_dimension_numbers<[1], [0], [0], [1], [0, 0, 1, 1], [], []>} : vector<192x8xf32>, vector<8x128xf32>, vector<192x128xf32> -> vector<192x128xf32>
    %c0_3 = arith.constant 0 : index
    %c0_4 = arith.constant 0 : index
    %3 = vector.load %arg3[%c0_3, %c0_4] : memref<192x1xf32, #tpu.memory_space<vmem>>, vector<192x1xf32>
    %4 = vector.broadcast %3 : vector<192x1xf32> to vector<192x128xf32>
    %5 = arith.addf %2, %4 : vector<192x128xf32>
    %cst_5 = arith.constant 0.000000e+00 : f32
    %6 = vector.broadcast %cst_5 : f32 to vector<192x128xf32>
    %7 = arith.maximumf %5, %6 : vector<192x128xf32>
    %c0_6 = arith.constant 0 : index
    %c0_7 = arith.constant 0 : index
    %8 = vector.load %arg4[%c0_6, %c0_7] : memref<256x192xf32, #tpu.memory_space<vmem>>, vector<256x192xf32>
    %cst_8 = arith.constant dense<0.000000e+00> : vector<256x128xf32>
    %9 = tpu.matmul %8, %7, %cst_8 {dimension_numbers = #tpu.dot_dimension_numbers<[1], [0], [0], [1], [0, 0, 1, 1], [], []>} : vector<256x192xf32>, vector<192x128xf32>, vector<256x128xf32> -> vector<256x128xf32>
    %c0_9 = arith.constant 0 : index
    %c0_10 = arith.constant 0 : index
    %10 = vector.load %arg5[%c0_9, %c0_10] : memref<256x1xf32, #tpu.memory_space<vmem>>, vector<256x1xf32>
    %11 = vector.broadcast %10 : vector<256x1xf32> to vector<256x128xf32>
    %12 = arith.addf %9, %11 : vector<256x128xf32>
    %cst_11 = arith.constant 0.000000e+00 : f32
    %13 = vector.broadcast %cst_11 : f32 to vector<256x128xf32>
    %14 = arith.maximumf %12, %13 : vector<256x128xf32>
    %c0_12 = arith.constant 0 : index
    %c0_13 = arith.constant 0 : index
    %15 = vector.load %arg6[%c0_12, %c0_13] : memref<128x256xf32, #tpu.memory_space<vmem>>, vector<128x256xf32>
    %cst_14 = arith.constant dense<0.000000e+00> : vector<128x128xf32>
    %16 = tpu.matmul %15, %14, %cst_14 {dimension_numbers = #tpu.dot_dimension_numbers<[1], [0], [0], [1], [0, 0, 1, 1], [], []>} : vector<128x256xf32>, vector<256x128xf32>, vector<128x128xf32> -> vector<128x128xf32>
    %c0_15 = arith.constant 0 : index
    %c0_16 = arith.constant 0 : index
    %17 = vector.load %arg7[%c0_15, %c0_16] : memref<128x1xf32, #tpu.memory_space<vmem>>, vector<128x1xf32>
    %18 = vector.broadcast %17 : vector<128x1xf32> to vector<128x128xf32>
    %19 = arith.addf %16, %18 : vector<128x128xf32>
    %cst_17 = arith.constant 0.000000e+00 : f32
    %20 = vector.broadcast %cst_17 : f32 to vector<128x128xf32>
    %21 = arith.maximumf %19, %20 : vector<128x128xf32>
    %c0_18 = arith.constant 0 : index
    %c0_19 = arith.constant 0 : index
    %22 = vector.load %arg8[%c0_18, %c0_19] : memref<128x1xf32, #tpu.memory_space<vmem>>, vector<128x1xf32>
    %23 = vector.broadcast %22 : vector<128x1xf32> to vector<128x128xf32>
    %24 = arith.mulf %21, %23 : vector<128x128xf32>
    %cst_20 = arith.constant dense<0.000000e+00> : vector<128xf32>
    %25 = vector.multi_reduction <add>, %24, %cst_20 [0] : vector<128x128xf32> to vector<128xf32>
    %26 = vector.shape_cast %25 : vector<128xf32> to vector<1x128xf32>
    %c0_21 = arith.constant 0 : index
    %c0_22 = arith.constant 0 : index
    %27 = vector.load %arg9[%c0_21, %c0_22] : memref<1x1xf32, #tpu.memory_space<vmem>>, vector<1x1xf32>
    %28 = vector.broadcast %27 : vector<1x1xf32> to vector<1x128xf32>
    %29 = arith.addf %26, %28 : vector<1x128xf32>
    %c0_23 = arith.constant 0 : index
    %c0_24 = arith.constant 0 : index
    %30 = vector.load %arg10[%c0_23, %c0_24] : memref<1x128xf32, #tpu.memory_space<vmem>>, vector<1x128xf32>
    tpu.vector_store %arg10[%c0_23, %c0_24], %29 {strides = array<i32>} : memref<1x128xf32, #tpu.memory_space<vmem>>, vector<1x128xf32>,
    return
  }
  func.func @transform_0(%arg0: i32) -> (i32, i32) {
    %c0_i32 = arith.constant 0 : i32
    %c0_i32_0 = arith.constant 0 : i32
    return %c0_i32, %arg0 : i32, i32
  }
  func.func @transform_1(%arg0: i32) -> (i32, i32) {
    %c0_i32 = arith.constant 0 : i32
    %c0_i32_0 = arith.constant 0 : i32
    %c0_i32_1 = arith.constant 0 : i32
    return %c0_i32, %c0_i32_0 : i32, i32
  }
  func.func @transform_2(%arg0: i32) -> (i32, i32) {
    %c0_i32 = arith.constant 0 : i32
    %c0_i32_0 = arith.constant 0 : i32
    %c0_i32_1 = arith.constant 0 : i32
    return %c0_i32, %c0_i32_0 : i32, i32
  }
  func.func @transform_3(%arg0: i32) -> (i32, i32) {
    %c0_i32 = arith.constant 0 : i32
    %c0_i32_0 = arith.constant 0 : i32
    %c0_i32_1 = arith.constant 0 : i32
    return %c0_i32, %c0_i32_0 : i32, i32
  }
  func.func @transform_4(%arg0: i32) -> (i32, i32) {
    %c0_i32 = arith.constant 0 : i32
    %c0_i32_0 = arith.constant 0 : i32
    %c0_i32_1 = arith.constant 0 : i32
    return %c0_i32, %c0_i32_0 : i32, i32
  }
  func.func @transform_5(%arg0: i32) -> (i32, i32) {
    %c0_i32 = arith.constant 0 : i32
    %c0_i32_0 = arith.constant 0 : i32
    %c0_i32_1 = arith.constant 0 : i32
    return %c0_i32, %c0_i32_0 : i32, i32
  }
  func.func @transform_6(%arg0: i32) -> (i32, i32) {
    %c0_i32 = arith.constant 0 : i32
    %c0_i32_0 = arith.constant 0 : i32
    %c0_i32_1 = arith.constant 0 : i32
    return %c0_i32, %c0_i32_0 : i32, i32
  }
  func.func @transform_7(%arg0: i32) -> (i32, i32) {
    %c0_i32 = arith.constant 0 : i32
    %c0_i32_0 = arith.constant 0 : i32
    %c0_i32_1 = arith.constant 0 : i32
    return %c0_i32, %c0_i32_0 : i32, i32
  }
  func.func @transform_8(%arg0: i32) -> (i32, i32) {
    %c0_i32 = arith.constant 0 : i32
    %c0_i32_0 = arith.constant 0 : i32
    %c0_i32_1 = arith.constant 0 : i32
    return %c0_i32, %c0_i32_0 : i32, i32
  }
  func.func @transform_9(%arg0: i32) -> (i32, i32) {
    %c0_i32 = arith.constant 0 : i32
    %c0_i32_0 = arith.constant 0 : i32
    return %c0_i32, %arg0 : i32, i32
  }
}

</mosaic_0001>

<llo_original>
// kernel: tpu_custom_call.1
$region0: #{tpu_custom_call.1}
  #allocation0 [shape = 'u32[]', space=smem, size = 0x4, offset = 0x4, fixed_abs, tag = 'smem constant byte address 0x4 - core index']
  #allocation1 [shape = 'u32[144,128]{1,0:T(1,128)}', space=vmem, size = 0x12000, scoped, tag = 'internal scratch']
  #allocation2 [shape = 'f32[1,1]{1,0:T(1,128)S(1)}', space=vmem, size = 0x200, scoped, tag = 'scoped memory for tpu_custom_call.1']
  %s0 = inlined_call_operand.vmem [shape: f32[8,128], index: 0, kind: input, shape index: {}]
  %s1 = inlined_call_operand.vmem [shape: f32[192,8], index: 1, kind: input, shape index: {}]
  %s2 = inlined_call_operand.vmem [shape: f32[192,1], index: 2, kind: input, shape index: {}]
  %s3 = inlined_call_operand.vmem [shape: f32[256,192], index: 3, kind: input, shape index: {}]
  %s4 = inlined_call_operand.vmem [shape: f32[256,1], index: 4, kind: input, shape index: {}]
  %s5 = inlined_call_operand.vmem [shape: f32[128,256], index: 5, kind: input, shape index: {}]
  %s6 = inlined_call_operand.vmem [shape: f32[128,1], index: 6, kind: input, shape index: {}]
  %s7 = inlined_call_operand.vmem [shape: f32[128,1], index: 7, kind: input, shape index: {}]
  %s8 = inlined_call_operand.<no memory space> [shape: f32[1,1], index: 8, kind: input, shape index: {}]
  %s9 = inlined_call_operand.hbm [shape: f32[1,128], index: 9, kind: output, shape index: {}]
  %s10 = sld [smem:[#allocation0]]
  $region46: #{tpu_custom_call.1} parent=0
    _
  %s12 = ssub.s32 1, %s10
  %s13 = scalar_select 0, %s12, %s10
  %v14 = vstv %s8
  %15 = vst [vmem:[#allocation2] sm:$0x1] %v14
  $region1: #{tpu_custom_call.1} parent=0
    #allocation3 [shape = 'u8[512]{0}', space=vmem, size = 0x400, scoped, tag = 'output window, operand 0, single buffered']
    #allocation4 [shape = 's32[1]{0}', space=sflag, size = 0x4, scoped, tag = 'scoped memory for tpu_custom_call.1']
    %16 = vsyncpa [#allocation4], 0
    // Predicated region
    $region2: #{tpu_custom_call.1} parent=1 // pred_check
      _
    $region3: #{tpu_custom_call.1} parent=1 // pred_check_branch
      %18 = sbr.rel (0) target = $region5
    $region4: #{tpu_custom_call.1} parent=1 // pred_region
      _
    $region5: #{tpu_custom_call.1} parent=1 // pred_fallthru
      _
    // Predicated region
    $region6: #{tpu_custom_call.1} parent=1 // pred_check
      _
    $region7: #{tpu_custom_call.1} parent=1 // pred_check_branch
      %20 = sbr.rel (0) target = $region9
    $region8: #{tpu_custom_call.1} parent=1 // pred_region
      _
    $region9: #{tpu_custom_call.1} parent=1 // pred_fallthru
      _
    // Predicated region
    $region10: #{tpu_custom_call.1} parent=1 // pred_check
      _
    $region11: #{tpu_custom_call.1} parent=1 // pred_check_branch
      %22 = sbr.rel (0) target = $region13
    $region12: #{tpu_custom_call.1} parent=1 // pred_region
      _
    $region13: #{tpu_custom_call.1} parent=1 // pred_fallthru
      _
    // Predicated region
    $region14: #{tpu_custom_call.1} parent=1 // pred_check
      _
    $region15: #{tpu_custom_call.1} parent=1 // pred_check_branch
      %24 = sbr.rel (0) target = $region17
    $region16: #{tpu_custom_call.1} parent=1 // pred_region
      _
    $region17: #{tpu_custom_call.1} parent=1 // pred_fallthru
      _
    // Predicated region
    $region18: #{tpu_custom_call.1} parent=1 // pred_check
      _
    $region19: #{tpu_custom_call.1} parent=1 // pred_check_branch
      %26 = sbr.rel (0) target = $region21
    $region20: #{tpu_custom_call.1} parent=1 // pred_region
      _
    $region21: #{tpu_custom_call.1} parent=1 // pred_fallthru
      _
    // Predicated region
    $region22: #{tpu_custom_call.1} parent=1 // pred_check
      _
    $region23: #{tpu_custom_call.1} parent=1 // pred_check_branch
      %28 = sbr.rel (0) target = $region25
    $region24: #{tpu_custom_call.1} parent=1 // pred_region
      _
    $region25: #{tpu_custom_call.1} parent=1 // pred_fallthru
      _
    // Predicated region
    $region26: #{tpu_custom_call.1} parent=1 // pred_check
      _
    $region27: #{tpu_custom_call.1} parent=1 // pred_check_branch
      %30 = sbr.rel (0) target = $region29
    $region28: #{tpu_custom_call.1} parent=1 // pred_region
      _
    $region29: #{tpu_custom_call.1} parent=1 // pred_fallthru
      _
    // Predicated region
    $region30: #{tpu_custom_call.1} parent=1 // pred_check
      _
    $region31: #{tpu_custom_call.1} parent=1 // pred_check_branch
      %32 = sbr.rel (0) target = $region33
    $region32: #{tpu_custom_call.1} parent=1 // pred_region
      _
    $region33: #{tpu_custom_call.1} parent=1 // pred_fallthru
      _
    // Predicated region
    $region34: #{tpu_custom_call.1} parent=1 // pred_check
      _
    $region35: #{tpu_custom_call.1} parent=1 // pred_check_branch
      %34 = sbr.rel (0) target = $region37
    $region36: #{tpu_custom_call.1} parent=1 // pred_region
      _
    $region37: #{tpu_custom_call.1} parent=1 // pred_fallthru
      _
    %v35 = vld [vmem:[%s1] sm:$0xff]
    %v36 = vld [vmem:[%s1 + $0x8] sm:$0xff]
    %v37 = vld [vmem:[%s1 + $0x10] sm:$0xff]
    %v38 = vld [vmem:[%s1 + $0x18] sm:$0xff]
    %v39 = vld [vmem:[%s1 + $0x20] sm:$0xff]
    %v40 = vld [vmem:[%s1 + $0x28] sm:$0xff]
    %v41 = vld [vmem:[%s1 + $0x30] sm:$0xff]
    %v42 = vld [vmem:[%s1 + $0x38] sm:$0xff]
    %v43 = vld [vmem:[%s1 + $0x40] sm:$0xff]
    %v44 = vld [vmem:[%s1 + $0x48] sm:$0xff]
    %v45 = vld [vmem:[%s1 + $0x50] sm:$0xff]
    %v46 = vld [vmem:[%s1 + $0x58] sm:$0xff]
    %v47 = vld [vmem:[%s1 + $0x60] sm:$0xff]
    %v48 = vld [vmem:[%s1 + $0x68] sm:$0xff]
    %v49 = vld [vmem:[%s1 + $0x70] sm:$0xff]
    %v50 = vld [vmem:[%s1 + $0x78] sm:$0xff]
    %v51 = vld [vmem:[%s1 + $0x80] sm:$0xff]
    %v52 = vld [vmem:[%s1 + $0x88] sm:$0xff]
    %v53 = vld [vmem:[%s1 + $0x90] sm:$0xff]
    %v54 = vld [vmem:[%s1 + $0x98] sm:$0xff]
    %v55 = vld [vmem:[%s1 + $0xa0] sm:$0xff]
    %v56 = vld [vmem:[%s1 + $0xa8] sm:$0xff]
    %v57 = vld [vmem:[%s1 + $0xb0] sm:$0xff]
    %v58 = vld [vmem:[%s1 + $0xb8] sm:$0xff]
    %v59 = vld [vmem:[%s0] sm:$0xff]
    %v60 = vld [vmem:[%s2] sm:$0xff]
    %v61 = vld [vmem:[%s2 + $0x8] sm:$0xff]
    %v62 = vld [vmem:[%s2 + $0x10] sm:$0xff]
    %v63 = vld [vmem:[%s2 + $0x18] sm:$0xff]
    %v64 = vld [vmem:[%s2 + $0x20] sm:$0xff]
    %v65 = vld [vmem:[%s2 + $0x28] sm:$0xff]
    %v66 = vld [vmem:[%s2 + $0x30] sm:$0xff]
    %v67 = vld [vmem:[%s2 + $0x38] sm:$0xff]
    %v68 = vld [vmem:[%s2 + $0x40] sm:$0xff]
    %v69 = vld [vmem:[%s2 + $0x48] sm:$0xff]
    %v70 = vld [vmem:[%s2 + $0x50] sm:$0xff]
    %v71 = vld [vmem:[%s2 + $0x58] sm:$0xff]
    %v72 = vld [vmem:[%s2 + $0x60] sm:$0xff]
    %v73 = vld [vmem:[%s2 + $0x68] sm:$0xff]
    %v74 = vld [vmem:[%s2 + $0x70] sm:$0xff]
    %v75 = vld [vmem:[%s2 + $0x78] sm:$0xff]
    %v76 = vld [vmem:[%s2 + $0x80] sm:$0xff]
    %v77 = vld [vmem:[%s2 + $0x88] sm:$0xff]
    %v78 = vld [vmem:[%s2 + $0x90] sm:$0xff]
    %v79 = vld [vmem:[%s2 + $0x98] sm:$0xff]
    %v80 = vld [vmem:[%s2 + $0xa0] sm:$0xff]
    %v81 = vld [vmem:[%s2 + $0xa8] sm:$0xff]
    %v82 = vld [vmem:[%s2 + $0xb0] sm:$0xff]
    %v83 = vld [vmem:[%s2 + $0xb8] sm:$0xff]
    %85 = vset.pattern.permute.xlu0 0
    %86 = vperm.xlu0 %85, %v60
    %v87 = vpop.permute.xlu0 %86
    %90 = vset.pattern.permute.xlu0 0
    %91 = vperm.xlu0 %90, %v61
    %v92 = vpop.permute.xlu0 %91
    %95 = vset.pattern.permute.xlu0 0
    %96 = vperm.xlu0 %95, %v62
    %v97 = vpop.permute.xlu0 %96
    %100 = vset.pattern.permute.xlu0 0
    %101 = vperm.xlu0 %100, %v63
    %v102 = vpop.permute.xlu0 %101
    %105 = vset.pattern.permute.xlu0 0
    %106 = vperm.xlu0 %105, %v64
    %v107 = vpop.permute.xlu0 %106
    %110 = vset.pattern.permute.xlu0 0
    %111 = vperm.xlu0 %110, %v65
    %v112 = vpop.permute.xlu0 %111
    %115 = vset.pattern.permute.xlu0 0
    %116 = vperm.xlu0 %115, %v66
    %v117 = vpop.permute.xlu0 %116
    %120 = vset.pattern.permute.xlu0 0
    %121 = vperm.xlu0 %120, %v67
    %v122 = vpop.permute.xlu0 %121
    %125 = vset.pattern.permute.xlu0 0
    %126 = vperm.xlu0 %125, %v68
    %v127 = vpop.permute.xlu0 %126
    %130 = vset.pattern.permute.xlu0 0
    %131 = vperm.xlu0 %130, %v69
    %v132 = vpop.permute.xlu0 %131
    %135 = vset.pattern.permute.xlu0 0
    %136 = vperm.xlu0 %135, %v70
    %v137 = vpop.permute.xlu0 %136
    %140 = vset.pattern.permute.xlu0 0
    %141 = vperm.xlu0 %140, %v71
    %v142 = vpop.permute.xlu0 %141
    %145 = vset.pattern.permute.xlu0 0
    %146 = vperm.xlu0 %145, %v72
    %v147 = vpop.permute.xlu0 %146
    %150 = vset.pattern.permute.xlu0 0
    %151 = vperm.xlu0 %150, %v73
    %v152 = vpop.permute.xlu0 %151
    %155 = vset.pattern.permute.xlu0 0
    %156 = vperm.xlu0 %155, %v74
    %v157 = vpop.permute.xlu0 %156
    %160 = vset.pattern.permute.xlu0 0
    %161 = vperm.xlu0 %160, %v75
    %v162 = vpop.permute.xlu0 %161
    %165 = vset.pattern.permute.xlu0 0
    %166 = vperm.xlu0 %165, %v76
    %v167 = vpop.permute.xlu0 %166
    %170 = vset.pattern.permute.xlu0 0
    %171 = vperm.xlu0 %170, %v77
    %v172 = vpop.permute.xlu0 %171
    %175 = vset.pattern.permute.xlu0 0
    %176 = vperm.xlu0 %175, %v78
    %v177 = vpop.permute.xlu0 %176
    %180 = vset.pattern.permute.xlu0 0
    %181 = vperm.xlu0 %180, %v79
    %v182 = vpop.permute.xlu0 %181
    %185 = vset.pattern.permute.xlu0 0
    %186 = vperm.xlu0 %185, %v80
    %v187 = vpop.permute.xlu0 %186
    %190 = vset.pattern.permute.xlu0 0
    %191 = vperm.xlu0 %190, %v81
    %v192 = vpop.permute.xlu0 %191
    %195 = vset.pattern.permute.xlu0 0
    %196 = vperm.xlu0 %195, %v82
    %v197 = vpop.permute.xlu0 %196
    %200 = vset.pattern.permute.xlu0 0
    %201 = vperm.xlu0 %200, %v83
    %v202 = vpop.permute.xlu0 %201
    %vm204 = vcmask 64512
    %v206 = vsel %vm204, %v35, 0
    %v209 = vsel %vm204, %v36, 0
    %v212 = vsel %vm204, %v37, 0
    %v215 = vsel %vm204, %v38, 0
    %v218 = vsel %vm204, %v39, 0
    %v221 = vsel %vm204, %v40, 0
    %v224 = vsel %vm204, %v41, 0
    %v227 = vsel %vm204, %v42, 0
    %v230 = vsel %vm204, %v43, 0
    %v233 = vsel %vm204, %v44, 0
    %v236 = vsel %vm204, %v45, 0
    %v239 = vsel %vm204, %v46, 0
    %v242 = vsel %vm204, %v47, 0
    %v245 = vsel %vm204, %v48, 0
    %v248 = vsel %vm204, %v49, 0
    %v251 = vsel %vm204, %v50, 0
    %v254 = vsel %vm204, %v51, 0
    %v257 = vsel %vm204, %v52, 0
    %v260 = vsel %vm204, %v53, 0
    %v263 = vsel %vm204, %v54, 0
    %v266 = vsel %vm204, %v55, 0
    %v269 = vsel %vm204, %v56, 0
    %v272 = vsel %vm204, %v57, 0
    %v275 = vsel %vm204, %v58, 0
    %277 = vmatprep.subr.mxu0 0.0
    %278 = vmatpush1.msra.mxu0 %v59
    %279 = vmatprep.subr.mxu0 0.0
    %280 = vmatpush1.msra.mxu0 0.0
    %281 = vmatprep.subr.mxu0 0.0
    %282 = vmatpush1.msra.mxu0 0.0
    %283 = vmatprep.subr.mxu0 0.0
    %284 = vmatpush1.msra.mxu0 0.0
    %285 = vmatprep.subr.mxu0 0.0
    %286 = vmatpush1.msra.mxu0 0.0
    %287 = vmatprep.subr.mxu0 0.0
    %288 = vmatpush1.msra.mxu0 0.0
    %289 = vmatprep.subr.mxu0 0.0
    %290 = vmatpush1.msra.mxu0 0.0
    %291 = vmatprep.subr.mxu0 0.0
    %292 = vmatpush1.msra.mxu0 0.0
    %293 = vmatprep.subr.mxu0 0.0
    %294 = vmatpush1.msra.mxu0 0.0
    %295 = vmatprep.subr.mxu0 0.0
    %296 = vmatpush1.msra.mxu0 0.0
    %297 = vmatprep.subr.mxu0 0.0
    %298 = vmatpush1.msra.mxu0 0.0
    %299 = vmatprep.subr.mxu0 0.0
    %300 = vmatpush1.msra.mxu0 0.0
    %301 = vmatprep.subr.mxu0 0.0
    %302 = vmatpush1.msra.mxu0 0.0
    %303 = vmatprep.subr.mxu0 0.0
    %304 = vmatpush1.msra.mxu0 0.0
    %305 = vmatprep.subr.mxu0 0.0
    %306 = vmatpush1.msra.mxu0 0.0
    %307 = vmatprep.subr.mxu0 0.0
    %308 = vmatpush1.msra.mxu0 0.0
    %309 = vmatprep.subr.mxu0 0.0
    %310 = vmatpush1.msra.mxu0 0.0
    %311 = vmatprep.subr.mxu0 0.0
    %312 = vmatpush1.msra.mxu0 0.0
    %313 = vmatprep.subr.mxu0 0.0
    %314 = vmatpush1.msra.mxu0 0.0
    %315 = vmatprep.subr.mxu0 0.0
    %316 = vmatpush1.msra.mxu0 0.0
    %317 = vmatprep.subr.mxu0 0.0
    %318 = vmatpush1.msra.mxu0 0.0
    %319 = vmatprep.subr.mxu0 0.0
    %320 = vmatpush1.msra.mxu0 0.0
    %321 = vmatprep.subr.mxu0 0.0
    %322 = vmatpush1.msra.mxu0 0.0
    %323 = vmatprep.subr.mxu0 0.0
    %324 = vmatpush1.msra.mxu0 0.0
    %325 = vmatprep.subr.mxu0 0.0
    %326 = vmatpush1.msra.mxu0 0.0
    %327 = vmatprep.subr.mxu0 0.0
    %328 = vmatpush1.msra.mxu0 0.0
    %329 = vmatprep.subr.mxu0 0.0
    %330 = vmatpush1.msra.mxu0 0.0
    %331 = vmatprep.subr.mxu0 0.0
    %332 = vmatpush1.msra.mxu0 0.0
    %333 = vmatprep.subr.mxu0 0.0
    %334 = vmatpush1.msra.mxu0 0.0
    %335 = vmatprep.subr.mxu0 0.0
    %336 = vmatpush1.msra.mxu0 0.0
    %337 = vmatprep.subr.mxu0 0.0
    %338 = vmatpush1.msra.mxu0 0.0
    %339 = vmatprep.subr.mxu0 0.0
    %340 = vmatpush1.msra.mxu0 0.0
    %341 = vmatprep.mubr.f32.mxu0 0.0
    %342 = vmatmul.mubr.f32.gmra.mrb[0].mxu0 %v206
    %v343 = vpop.f32.mrb[0].mxu0
    %v344 = vadd.f32 %v87, %v343
    %v345 = vpop.f32.mrb[0].mxu0
    %346 = vmatprep.mubr.f32.mxu0 0.0
    %347 = vmatmul.mubr.f32.gmra.mrb[0].mxu0 %v209
    %v348 = vpop.f32.mrb[0].mxu0
    %v349 = vadd.f32 %v92, %v348
    %v350 = vpop.f32.mrb[0].mxu0
    %351 = vmatprep.mubr.f32.mxu0 0.0
    %352 = vmatmul.mubr.f32.gmra.mrb[0].mxu0 %v212
    %v353 = vpop.f32.mrb[0].mxu0
    %v354 = vadd.f32 %v97, %v353
    %v355 = vpop.f32.mrb[0].mxu0
    %356 = vmatprep.mubr.f32.mxu0 0.0
    %357 = vmatmul.mubr.f32.gmra.mrb[0].mxu0 %v215
    %v358 = vpop.f32.mrb[0].mxu0
    %v359 = vadd.f32 %v102, %v358
    %v360 = vpop.f32.mrb[0].mxu0
    %361 = vmatprep.mubr.f32.mxu0 0.0
    %362 = vmatmul.mubr.f32.gmra.mrb[0].mxu0 %v218
    %v363 = vpop.f32.mrb[0].mxu0
    %v364 = vadd.f32 %v107, %v363
    %v365 = vpop.f32.mrb[0].mxu0
    %366 = vmatprep.mubr.f32.mxu0 0.0
    %367 = vmatmul.mubr.f32.gmra.mrb[0].mxu0 %v221
    %v368 = vpop.f32.mrb[0].mxu0
    %v369 = vadd.f32 %v112, %v368
    %v370 = vpop.f32.mrb[0].mxu0
    %371 = vmatprep.mubr.f32.mxu0 0.0
    %372 = vmatmul.mubr.f32.gmra.mrb[0].mxu0 %v224
    %v373 = vpop.f32.mrb[0].mxu0
    %v374 = vadd.f32 %v117, %v373
    %v375 = vpop.f32.mrb[0].mxu0
    %376 = vmatprep.mubr.f32.mxu0 0.0
    %377 = vmatmul.mubr.f32.gmra.mrb[0].mxu0 %v227
    %v378 = vpop.f32.mrb[0].mxu0
    %v379 = vadd.f32 %v122, %v378
    %v380 = vpop.f32.mrb[0].mxu0
    %381 = vmatprep.mubr.f32.mxu0 0.0
    %382 = vmatmul.mubr.f32.gmra.mrb[0].mxu0 %v230
    %v383 = vpop.f32.mrb[0].mxu0
    %v384 = vadd.f32 %v127, %v383
    %v385 = vpop.f32.mrb[0].mxu0
    %386 = vmatprep.mubr.f32.mxu0 0.0
    %387 = vmatmul.mubr.f32.gmra.mrb[0].mxu0 %v233
    %v388 = vpop.f32.mrb[0].mxu0
    %v389 = vadd.f32 %v132, %v388
    %v390 = vpop.f32.mrb[0].mxu0
    %391 = vmatprep.mubr.f32.mxu0 0.0
    %392 = vmatmul.mubr.f32.gmra.mrb[0].mxu0 %v236
    %v393 = vpop.f32.mrb[0].mxu0
    %v394 = vadd.f32 %v137, %v393
    %v395 = vpop.f32.mrb[0].mxu0
    %396 = vmatprep.mubr.f32.mxu0 0.0
    %397 = vmatmul.mubr.f32.gmra.mrb[0].mxu0 %v239
    %v398 = vpop.f32.mrb[0].mxu0
    %v399 = vadd.f32 %v142, %v398
    %v400 = vpop.f32.mrb[0].mxu0
    %401 = vmatprep.mubr.f32.mxu0 0.0
    %402 = vmatmul.mubr.f32.gmra.mrb[0].mxu0 %v242
    %v403 = vpop.f32.mrb[0].mxu0
    %v404 = vadd.f32 %v147, %v403
    %v405 = vpop.f32.mrb[0].mxu0
    %406 = vmatprep.mubr.f32.mxu0 0.0
    %407 = vmatmul.mubr.f32.gmra.mrb[0].mxu0 %v245
    %v408 = vpop.f32.mrb[0].mxu0
    %v409 = vadd.f32 %v152, %v408
    %v410 = vpop.f32.mrb[0].mxu0
    %411 = vmatprep.mubr.f32.mxu0 0.0
    %412 = vmatmul.mubr.f32.gmra.mrb[0].mxu0 %v248
    %v413 = vpop.f32.mrb[0].mxu0
    %v414 = vadd.f32 %v157, %v413
    %v415 = vpop.f32.mrb[0].mxu0
    %416 = vmatprep.mubr.f32.mxu0 0.0
    %417 = vmatmul.mubr.f32.gmra.mrb[0].mxu0 %v251
    %v418 = vpop.f32.mrb[0].mxu0
    %v419 = vadd.f32 %v162, %v418
    %v420 = vpop.f32.mrb[0].mxu0
    %421 = vmatprep.mubr.f32.mxu0 0.0
    %422 = vmatmul.mubr.f32.gmra.mrb[0].mxu0 %v254
    %v423 = vpop.f32.mrb[0].mxu0
    %v424 = vadd.f32 %v167, %v423
    %v425 = vpop.f32.mrb[0].mxu0
    %426 = vmatprep.mubr.f32.mxu0 0.0
    %427 = vmatmul.mubr.f32.gmra.mrb[0].mxu0 %v257
    %v428 = vpop.f32.mrb[0].mxu0
    %v429 = vadd.f32 %v172, %v428
    %v430 = vpop.f32.mrb[0].mxu0
    %431 = vmatprep.mubr.f32.mxu0 0.0
    %432 = vmatmul.mubr.f32.gmra.mrb[0].mxu0 %v260
    %v433 = vpop.f32.mrb[0].mxu0
    %v434 = vadd.f32 %v177, %v433
    %v435 = vpop.f32.mrb[0].mxu0
    %436 = vmatprep.mubr.f32.mxu0 0.0
    %437 = vmatmul.mubr.f32.gmra.mrb[0].mxu0 %v263
    %v438 = vpop.f32.mrb[0].mxu0
    %v439 = vadd.f32 %v182, %v438
    %v440 = vpop.f32.mrb[0].mxu0
    %441 = vmatprep.mubr.f32.mxu0 0.0
    %442 = vmatmul.mubr.f32.gmra.mrb[0].mxu0 %v266
    %v443 = vpop.f32.mrb[0].mxu0
    %v444 = vadd.f32 %v187, %v443
    %v445 = vpop.f32.mrb[0].mxu0
    %446 = vmatprep.mubr.f32.mxu0 0.0
    %447 = vmatmul.mubr.f32.gmra.mrb[0].mxu0 %v269
    %v448 = vpop.f32.mrb[0].mxu0
    %v449 = vadd.f32 %v192, %v448
    %v450 = vpop.f32.mrb[0].mxu0
    %451 = vmatprep.mubr.f32.mxu0 0.0
    %452 = vmatmul.mubr.f32.gmra.mrb[0].mxu0 %v272
    %v453 = vpop.f32.mrb[0].mxu0
    %v454 = vadd.f32 %v197, %v453
    %v455 = vpop.f32.mrb[0].mxu0
    %456 = vmatprep.mubr.f32.mxu0 0.0
    %457 = vmatmul.mubr.f32.gmra.mrb[0].mxu0 %v275
    %v458 = vpop.f32.mrb[0].mxu0
    %v459 = vadd.f32 %v202, %v458
    %v460 = vpop.f32.mrb[0].mxu0
    %461 = vdwg.mxu0
    %v462 = vmax.f32 %v344, 0.0
    %v463 = vmax.f32 %v349, 0.0
    %v464 = vmax.f32 %v354, 0.0
    %v465 = vmax.f32 %v359, 0.0
    %v466 = vmax.f32 %v364, 0.0
    %v467 = vmax.f32 %v369, 0.0
    %v468 = vmax.f32 %v374, 0.0
    %v469 = vmax.f32 %v379, 0.0
    %v470 = vmax.f32 %v384, 0.0
    %v471 = vmax.f32 %v389, 0.0
    %v472 = vmax.f32 %v394, 0.0
    %v473 = vmax.f32 %v399, 0.0
    %v474 = vmax.f32 %v404, 0.0
    %v475 = vmax.f32 %v409, 0.0
    %v476 = vmax.f32 %v414, 0.0
    %v477 = vmax.f32 %v419, 0.0
    %v478 = vmax.f32 %v424, 0.0
    %v479 = vmax.f32 %v429, 0.0
    %v480 = vmax.f32 %v434, 0.0
    %v481 = vmax.f32 %v439, 0.0
    %v482 = vmax.f32 %v444, 0.0
    %v483 = vmax.f32 %v449, 0.0
    %v484 = vmax.f32 %v454, 0.0
    %v485 = vmax.f32 %v459, 0.0
    %v486 = vld [vmem:[%s3] sm:$0xff]
    %v487 = vld [vmem:[%s3 + $0x8] sm:$0xff]
    %v488 = vld [vmem:[%s3 + $0x10] sm:$0xff]
    %v489 = vld [vmem:[%s3 + $0x18] sm:$0xff]
    %v490 = vld [vmem:[%s3 + $0x20] sm:$0xff]
    %v491 = vld [vmem:[%s3 + $0x28] sm:$0xff]
    %v492 = vld [vmem:[%s3 + $0x30] sm:$0xff]
    %v493 = vld [vmem:[%s3 + $0x38] sm:$0xff]
    %v494 = vld [vmem:[%s3 + $0x40] sm:$0xff]
    %v495 = vld [vmem:[%s3 + $0x48] sm:$0xff]
    %v496 = vld [vmem:[%s3 + $0x50] sm:$0xff]
    %v497 = vld [vmem:[%s3 + $0x58] sm:$0xff]
    %v498 = vld [vmem:[%s3 + $0x60] sm:$0xff]
    %v499 = vld [vmem:[%s3 + $0x68] sm:$0xff]
    %v500 = vld [vmem:[%s3 + $0x70] sm:$0xff]
    %v501 = vld [vmem:[%s3 + $0x78] sm:$0xff]
    %v502 = vld [vmem:[%s3 + $0x80] sm:$0xff]
    %v503 = vld [vmem:[%s3 + $0x88] sm:$0xff]
    %v504 = vld [vmem:[%s3 + $0x90] sm:$0xff]
    %v505 = vld [vmem:[%s3 + $0x98] sm:$0xff]
    %v506 = vld [vmem:[%s3 + $0xa0] sm:$0xff]
    %v507 = vld [vmem:[%s3 + $0xa8] sm:$0xff]
    %v508 = vld [vmem:[%s3 + $0xb0] sm:$0xff]
    %v509 = vld [vmem:[%s3 + $0xb8] sm:$0xff]
    %v510 = vld [vmem:[%s3 + $0xc0] sm:$0xff]
    %v511 = vld [vmem:[%s3 + $0xc8] sm:$0xff]
    %v512 = vld [vmem:[%s3 + $0xd0] sm:$0xff]
    %v513 = vld [vmem:[%s3 + $0xd8] sm:$0xff]
    %v514 = vld [vmem:[%s3 + $0xe0] sm:$0xff]
    %v515 = vld [vmem:[%s3 + $0xe8] sm:$0xff]
    %v516 = vld [vmem:[%s3 + $0xf0] sm:$0xff]
    %v517 = vld [vmem:[%s3 + $0xf8] sm:$0xff]
    %v518 = vld [vmem:[%s3 + $0x100] sm:$0xff]
    %v519 = vld [vmem:[%s3 + $0x108] sm:$0xff]
    %v520 = vld [vmem:[%s3 + $0x110] sm:$0xff]
    %v521 = vld [vmem:[%s3 + $0x118] sm:$0xff]
    %v522 = vld [vmem:[%s3 + $0x120] sm:$0xff]
    %v523 = vld [vmem:[%s3 + $0x128] sm:$0xff]
    %v524 = vld [vmem:[%s3 + $0x130] sm:$0xff]
    %v525 = vld [vmem:[%s3 + $0x138] sm:$0xff]
    %v526 = vld [vmem:[%s3 + $0x140] sm:$0xff]
    %v527 = vld [vmem:[%s3 + $0x148] sm:$0xff]
    %v528 = vld [vmem:[%s3 + $0x150] sm:$0xff]
    %v529 = vld [vmem:[%s3 + $0x158] sm:$0xff]
    %v530 = vld [vmem:[%s3 + $0x160] sm:$0xff]
    %v531 = vld [vmem:[%s3 + $0x168] sm:$0xff]
    %v532 = vld [vmem:[%s3 + $0x170] sm:$0xff]
    %v533 = vld [vmem:[%s3 + $0x178] sm:$0xff]
    %v534 = vld [vmem:[%s3 + $0x180] sm:$0xff]
    %v535 = vld [vmem:[%s3 + $0x188] sm:$0xff]
    %v536 = vld [vmem:[%s3 + $0x190] sm:$0xff]
    %v537 = vld [vmem:[%s3 + $0x198] sm:$0xff]
    %v538 = vld [vmem:[%s3 + $0x1a0] sm:$0xff]
    %v539 = vld [vmem:[%s3 + $0x1a8] sm:$0xff]
    %v540 = vld [vmem:[%s3 + $0x1b0] sm:$0xff]
    %v541 = vld [vmem:[%s3 + $0x1b8] sm:$0xff]
    %v542 = vld [vmem:[%s3 + $0x1c0] sm:$0xff]
    %v543 = vld [vmem:[%s3 + $0x1c8] sm:$0xff]
    %v544 = vld [vmem:[%s3 + $0x1d0] sm:$0xff]
    %v545 = vld [vmem:[%s3 + $0x1d8] sm:$0xff]
    %v546 = vld [vmem:[%s3 + $0x1e0] sm:$0xff]
    %v547 = vld [vmem:[%s3 + $0x1e8] sm:$0xff]
    %v548 = vld [vmem:[%s3 + $0x1f0] sm:$0xff]
    %v549 = vld [vmem:[%s3 + $0x1f8] sm:$0xff]
    %v550 = vld [vmem:[%s4] sm:$0xff]
    %v551 = vld [vmem:[%s4 + $0x8] sm:$0xff]
    %v552 = vld [vmem:[%s4 + $0x10] sm:$0xff]
    %v553 = vld [vmem:[%s4 + $0x18] sm:$0xff]
    %v554 = vld [vmem:[%s4 + $0x20] sm:$0xff]
    %v555 = vld [vmem:[%s4 + $0x28] sm:$0xff]
    %v556 = vld [vmem:[%s4 + $0x30] sm:$0xff]
    %v557 = vld [vmem:[%s4 + $0x38] sm:$0xff]
    %v558 = vld [vmem:[%s4 + $0x40] sm:$0xff]
    %v559 = vld [vmem:[%s4 + $0x48] sm:$0xff]
    %v560 = vld [vmem:[%s4 + $0x50] sm:$0xff]
    %v561 = vld [vmem:[%s4 + $0x58] sm:$0xff]
    %v562 = vld [vmem:[%s4 + $0x60] sm:$0xff]
    %v563 = vld [vmem:[%s4 + $0x68] sm:$0xff]
    %v564 = vld [vmem:[%s4 + $0x70] sm:$0xff]
    %v565 = vld [vmem:[%s4 + $0x78] sm:$0xff]
    %v566 = vld [vmem:[%s4 + $0x80] sm:$0xff]
    %v567 = vld [vmem:[%s4 + $0x88] sm:$0xff]
    %v568 = vld [vmem:[%s4 + $0x90] sm:$0xff]
    %v569 = vld [vmem:[%s4 + $0x98] sm:$0xff]
    %v570 = vld [vmem:[%s4 + $0xa0] sm:$0xff]
    %v571 = vld [vmem:[%s4 + $0xa8] sm:$0xff]
    %v572 = vld [vmem:[%s4 + $0xb0] sm:$0xff]
    %v573 = vld [vmem:[%s4 + $0xb8] sm:$0xff]
    %v574 = vld [vmem:[%s4 + $0xc0] sm:$0xff]
    %v575 = vld [vmem:[%s4 + $0xc8] sm:$0xff]
    %v576 = vld [vmem:[%s4 + $0xd0] sm:$0xff]
    %v577 = vld [vmem:[%s4 + $0xd8] sm:$0xff]
    %v578 = vld [vmem:[%s4 + $0xe0] sm:$0xff]
    %v579 = vld [vmem:[%s4 + $0xe8] sm:$0xff]
    %v580 = vld [vmem:[%s4 + $0xf0] sm:$0xff]
    %v581 = vld [vmem:[%s4 + $0xf8] sm:$0xff]
    %583 = vset.pattern.permute.xlu0 0
    %584 = vperm.xlu0 %583, %v550
    %v585 = vpop.permute.xlu0 %584
    %588 = vset.pattern.permute.xlu0 0
    %589 = vperm.xlu0 %588, %v551
    %v590 = vpop.permute.xlu0 %589
    %593 = vset.pattern.permute.xlu0 0
    %594 = vperm.xlu0 %593, %v552
    %v595 = vpop.permute.xlu0 %594
    %598 = vset.pattern.permute.xlu0 0
    %599 = vperm.xlu0 %598, %v553
    %v600 = vpop.permute.xlu0 %599
    %603 = vset.pattern.permute.xlu0 0
    %604 = vperm.xlu0 %603, %v554
    %v605 = vpop.permute.xlu0 %604
    %608 = vset.pattern.permute.xlu0 0
    %609 = vperm.xlu0 %608, %v555
    %v610 = vpop.permute.xlu0 %609
    %613 = vset.pattern.permute.xlu0 0
    %614 = vperm.xlu0 %613, %v556
    %v615 = vpop.permute.xlu0 %614
    %618 = vset.pattern.permute.xlu0 0
    %619 = vperm.xlu0 %618, %v557
    %v620 = vpop.permute.xlu0 %619
    %623 = vset.pattern.permute.xlu0 0
    %624 = vperm.xlu0 %623, %v558
    %v625 = vpop.permute.xlu0 %624
    %628 = vset.pattern.permute.xlu0 0
    %629 = vperm.xlu0 %628, %v559
    %v630 = vpop.permute.xlu0 %629
    %633 = vset.pattern.permute.xlu0 0
    %634 = vperm.xlu0 %633, %v560
    %v635 = vpop.permute.xlu0 %634
    %638 = vset.pattern.permute.xlu0 0
    %639 = vperm.xlu0 %638, %v561
    %v640 = vpop.permute.xlu0 %639
    %643 = vset.pattern.permute.xlu0 0
    %644 = vperm.xlu0 %643, %v562
    %v645 = vpop.permute.xlu0 %644
    %648 = vset.pattern.permute.xlu0 0
    %649 = vperm.xlu0 %648, %v563
    %v650 = vpop.permute.xlu0 %649
    %653 = vset.pattern.permute.xlu0 0
    %654 = vperm.xlu0 %653, %v564
    %v655 = vpop.permute.xlu0 %654
    %658 = vset.pattern.permute.xlu0 0
    %659 = vperm.xlu0 %658, %v565
    %v660 = vpop.permute.xlu0 %659
    %663 = vset.pattern.permute.xlu0 0
    %664 = vperm.xlu0 %663, %v566
    %v665 = vpop.permute.xlu0 %664
    %668 = vset.pattern.permute.xlu0 0
    %669 = vperm.xlu0 %668, %v567
    %v670 = vpop.permute.xlu0 %669
    %673 = vset.pattern.permute.xlu0 0
    %674 = vperm.xlu0 %673, %v568
    %v675 = vpop.permute.xlu0 %674
    %678 = vset.pattern.permute.xlu0 0
    %679 = vperm.xlu0 %678, %v569
    %v680 = vpop.permute.xlu0 %679
    %683 = vset.pattern.permute.xlu0 0
    %684 = vperm.xlu0 %683, %v570
    %v685 = vpop.permute.xlu0 %684
    %688 = vset.pattern.permute.xlu0 0
    %689 = vperm.xlu0 %688, %v571
    %v690 = vpop.permute.xlu0 %689
    %693 = vset.pattern.permute.xlu0 0
    %694 = vperm.xlu0 %693, %v572
    %v695 = vpop.permute.xlu0 %694
    %698 = vset.pattern.permute.xlu0 0
    %699 = vperm.xlu0 %698, %v573
    %v700 = vpop.permute.xlu0 %699
    %703 = vset.pattern.permute.xlu0 0
    %704 = vperm.xlu0 %703, %v574
    %v705 = vpop.permute.xlu0 %704
    %708 = vset.pattern.permute.xlu0 0
    %709 = vperm.xlu0 %708, %v575
    %v710 = vpop.permute.xlu0 %709
    %713 = vset.pattern.permute.xlu0 0
    %714 = vperm.xlu0 %713, %v576
    %v715 = vpop.permute.xlu0 %714
    %718 = vset.pattern.permute.xlu0 0
    %719 = vperm.xlu0 %718, %v577
    %v720 = vpop.permute.xlu0 %719
    %723 = vset.pattern.permute.xlu0 0
    %724 = vperm.xlu0 %723, %v578
    %v725 = vpop.permute.xlu0 %724
    %728 = vset.pattern.permute.xlu0 0
    %729 = vperm.xlu0 %728, %v579
    %v730 = vpop.permute.xlu0 %729
    %733 = vset.pattern.permute.xlu0 0
    %734 = vperm.xlu0 %733, %v580
    %v735 = vpop.permute.xlu0 %734
    %738 = vset.pattern.permute.xlu0 0
    %739 = vperm.xlu0 %738, %v581
    %v740 = vpop.permute.xlu0 %739
    %vm742 = vcmask 523264
    %v744 = vsel %vm742, %v487, 0
    %v747 = vsel %vm742, %v489, 0
    %v750 = vsel %vm742, %v491, 0
    %v753 = vsel %vm742, %v493, 0
    %v756 = vsel %vm742, %v495, 0
    %v759 = vsel %vm742, %v497, 0
    %v762 = vsel %vm742, %v499, 0
    %v765 = vsel %vm742, %v501, 0
    %v768 = vsel %vm742, %v503, 0
    %v771 = vsel %vm742, %v505, 0
    %v774 = vsel %vm742, %v507, 0
    %v777 = vsel %vm742, %v509, 0
    %v780 = vsel %vm742, %v511, 0
    %v783 = vsel %vm742, %v513, 0
    %v786 = vsel %vm742, %v515, 0
    %v789 = vsel %vm742, %v517, 0
    %v792 = vsel %vm742, %v519, 0
    %v795 = vsel %vm742, %v521, 0
    %v798 = vsel %vm742, %v523, 0
    %v801 = vsel %vm742, %v525, 0
    %v804 = vsel %vm742, %v527, 0
    %v807 = vsel %vm742, %v529, 0
    %v810 = vsel %vm742, %v531, 0
    %v813 = vsel %vm742, %v533, 0
    %v816 = vsel %vm742, %v535, 0
    %v819 = vsel %vm742, %v537, 0
    %v822 = vsel %vm742, %v539, 0
    %v825 = vsel %vm742, %v541, 0
    %v828 = vsel %vm742, %v543, 0
    %v831 = vsel %vm742, %v545, 0
    %v834 = vsel %vm742, %v547, 0
    %v837 = vsel %vm742, %v549, 0
    %839 = vmatprep.subr.mxu0 0.0
    %840 = vmatpush1.msra.mxu0 %v462
    %841 = vmatprep.subr.mxu0 0.0
    %842 = vmatpush1.msra.mxu0 %v463
    %843 = vmatprep.subr.mxu0 0.0
    %844 = vmatpush1.msra.mxu0 %v464
    %845 = vmatprep.subr.mxu0 0.0
    %846 = vmatpush1.msra.mxu0 %v465
    %847 = vmatprep.subr.mxu0 0.0
    %848 = vmatpush1.msra.mxu0 %v466
    %849 = vmatprep.subr.mxu0 0.0
    %850 = vmatpush1.msra.mxu0 %v467
    %851 = vmatprep.subr.mxu0 0.0
    %852 = vmatpush1.msra.mxu0 %v468
    %853 = vmatprep.subr.mxu0 0.0
    %854 = vmatpush1.msra.mxu0 %v469
    %855 = vmatprep.subr.mxu0 0.0
    %856 = vmatpush1.msra.mxu0 %v470
    %857 = vmatprep.subr.mxu0 0.0
    %858 = vmatpush1.msra.mxu0 %v471
    %859 = vmatprep.subr.mxu0 0.0
    %860 = vmatpush1.msra.mxu0 %v472
    %861 = vmatprep.subr.mxu0 0.0
    %862 = vmatpush1.msra.mxu0 %v473
    %863 = vmatprep.subr.mxu0 0.0
    %864 = vmatpush1.msra.mxu0 %v474
    %865 = vmatprep.subr.mxu0 0.0
    %866 = vmatpush1.msra.mxu0 %v475
    %867 = vmatprep.subr.mxu0 0.0
    %868 = vmatpush1.msra.mxu0 %v476
    %869 = vmatprep.subr.mxu0 0.0
    %870 = vmatpush1.msra.mxu0 %v477
    %871 = vmatprep.subr.mxu0 0.0
    %872 = vmatpush1.msra.mxu0 %v478
    %873 = vmatprep.subr.mxu0 0.0
    %874 = vmatpush1.msra.mxu0 %v479
    %875 = vmatprep.subr.mxu0 0.0
    %876 = vmatpush1.msra.mxu0 %v480
    %877 = vmatprep.subr.mxu0 0.0
    %878 = vmatpush1.msra.mxu0 %v481
    %879 = vmatprep.subr.mxu0 0.0
    %880 = vmatpush1.msra.mxu0 %v482
    %881 = vmatprep.subr.mxu0 0.0
    %882 = vmatpush1.msra.mxu0 %v483
    %883 = vmatprep.subr.mxu0 0.0
    %884 = vmatpush1.msra.mxu0 %v484
    %885 = vmatprep.subr.mxu0 0.0
    %886 = vmatpush1.msra.mxu0 %v485
    %887 = vmatprep.subr.mxu0 0.0
    %888 = vmatpush1.msra.mxu0 0.0
    %889 = vmatprep.subr.mxu0 0.0
    %890 = vmatpush1.msra.mxu0 0.0
    %891 = vmatprep.subr.mxu0 0.0
    %892 = vmatpush1.msra.mxu0 0.0
    %893 = vmatprep.subr.mxu0 0.0
    %894 = vmatpush1.msra.mxu0 0.0
    %895 = vmatprep.subr.mxu0 0.0
    %896 = vmatpush1.msra.mxu0 0.0
    %897 = vmatprep.subr.mxu0 0.0
    %898 = vmatpush1.msra.mxu0 0.0
    %899 = vmatprep.subr.mxu0 0.0
    %900 = vmatpush1.msra.mxu0 0.0
    %901 = vmatprep.subr.mxu0 0.0
    %902 = vmatpush1.msra.mxu0 0.0
    %903 = vmatprep.mubr.f32.mxu0 %v744
    %904 = vmatmul.mubr.f32.gmra.mrb[0].mxu0 %v486
    %v905 = vpop.f32.mrb[0].mxu0
    %v906 = vadd.f32 %v585, %v905
    %v907 = vpop.f32.mrb[0].mxu0
    %908 = vmatprep.mubr.f32.mxu0 %v747
    %909 = vmatmul.mubr.f32.gmra.mrb[0].mxu0 %v488
    %v910 = vpop.f32.mrb[0].mxu0
    %v911 = vadd.f32 %v590, %v910
    %v912 = vpop.f32.mrb[0].mxu0
    %913 = vmatprep.mubr.f32.mxu0 %v750
    %914 = vmatmul.mubr.f32.gmra.mrb[0].mxu0 %v490
    %v915 = vpop.f32.mrb[0].mxu0
    %v916 = vadd.f32 %v595, %v915
    %v917 = vpop.f32.mrb[0].mxu0
    %918 = vmatprep.mubr.f32.mxu0 %v753
    %919 = vmatmul.mubr.f32.gmra.mrb[0].mxu0 %v492
    %v920 = vpop.f32.mrb[0].mxu0
    %v921 = vadd.f32 %v600, %v920
    %v922 = vpop.f32.mrb[0].mxu0
    %923 = vmatprep.mubr.f32.mxu0 %v756
    %924 = vmatmul.mubr.f32.gmra.mrb[0].mxu0 %v494
    %v925 = vpop.f32.mrb[0].mxu0
    %v926 = vadd.f32 %v605, %v925
    %v927 = vpop.f32.mrb[0].mxu0
    %928 = vmatprep.mubr.f32.mxu0 %v759
    %929 = vmatmul.mubr.f32.gmra.mrb[0].mxu0 %v496
    %v930 = vpop.f32.mrb[0].mxu0
    %v931 = vadd.f32 %v610, %v930
    %v932 = vpop.f32.mrb[0].mxu0
    %933 = vmatprep.mubr.f32.mxu0 %v762
    %934 = vmatmul.mubr.f32.gmra.mrb[0].mxu0 %v498
    %v935 = vpop.f32.mrb[0].mxu0
    %v936 = vadd.f32 %v615, %v935
    %v937 = vpop.f32.mrb[0].mxu0
    %938 = vmatprep.mubr.f32.mxu0 %v765
    %939 = vmatmul.mubr.f32.gmra.mrb[0].mxu0 %v500
    %v940 = vpop.f32.mrb[0].mxu0
    %v941 = vadd.f32 %v620, %v940
    %v942 = vpop.f32.mrb[0].mxu0
    %943 = vmatprep.mubr.f32.mxu0 %v768
    %944 = vmatmul.mubr.f32.gmra.mrb[0].mxu0 %v502
    %v945 = vpop.f32.mrb[0].mxu0
    %v946 = vadd.f32 %v625, %v945
    %v947 = vpop.f32.mrb[0].mxu0
    %948 = vmatprep.mubr.f32.mxu0 %v771
    %949 = vmatmul.mubr.f32.gmra.mrb[0].mxu0 %v504
    %v950 = vpop.f32.mrb[0].mxu0
    %v951 = vadd.f32 %v630, %v950
    %v952 = vpop.f32.mrb[0].mxu0
    %953 = vmatprep.mubr.f32.mxu0 %v774
    %954 = vmatmul.mubr.f32.gmra.mrb[0].mxu0 %v506
    %v955 = vpop.f32.mrb[0].mxu0
    %v956 = vadd.f32 %v635, %v955
    %v957 = vpop.f32.mrb[0].mxu0
    %958 = vmatprep.mubr.f32.mxu0 %v777
    %959 = vmatmul.mubr.f32.gmra.mrb[0].mxu0 %v508
    %v960 = vpop.f32.mrb[0].mxu0
    %v961 = vadd.f32 %v640, %v960
    %v962 = vpop.f32.mrb[0].mxu0
    %963 = vmatprep.mubr.f32.mxu0 %v780
    %964 = vmatmul.mubr.f32.gmra.mrb[0].mxu0 %v510
    %v965 = vpop.f32.mrb[0].mxu0
    %v966 = vadd.f32 %v645, %v965
    %v967 = vpop.f32.mrb[0].mxu0
    %968 = vmatprep.mubr.f32.mxu0 %v783
    %969 = vmatmul.mubr.f32.gmra.mrb[0].mxu0 %v512
    %v970 = vpop.f32.mrb[0].mxu0
    %v971 = vadd.f32 %v650, %v970
    %v972 = vpop.f32.mrb[0].mxu0
    %973 = vmatprep.mubr.f32.mxu0 %v786
    %974 = vmatmul.mubr.f32.gmra.mrb[0].mxu0 %v514
    %v975 = vpop.f32.mrb[0].mxu0
    %v976 = vadd.f32 %v655, %v975
    %v977 = vpop.f32.mrb[0].mxu0
    %978 = vmatprep.mubr.f32.mxu0 %v789
    %979 = vmatmul.mubr.f32.gmra.mrb[0].mxu0 %v516
    %v980 = vpop.f32.mrb[0].mxu0
    %v981 = vadd.f32 %v660, %v980
    %v982 = vpop.f32.mrb[0].mxu0
    %983 = vmatprep.mubr.f32.mxu0 %v792
    %984 = vmatmul.mubr.f32.gmra.mrb[0].mxu0 %v518
    %v985 = vpop.f32.mrb[0].mxu0
    %v986 = vadd.f32 %v665, %v985
    %v987 = vpop.f32.mrb[0].mxu0
    %988 = vmatprep.mubr.f32.mxu0 %v795
    %989 = vmatmul.mubr.f32.gmra.mrb[0].mxu0 %v520
    %v990 = vpop.f32.mrb[0].mxu0
    %v991 = vadd.f32 %v670, %v990
    %v992 = vpop.f32.mrb[0].mxu0
    %993 = vmatprep.mubr.f32.mxu0 %v798
    %994 = vmatmul.mubr.f32.gmra.mrb[0].mxu0 %v522
    %v995 = vpop.f32.mrb[0].mxu0
    %v996 = vadd.f32 %v675, %v995
    %v997 = vpop.f32.mrb[0].mxu0
    %998 = vmatprep.mubr.f32.mxu0 %v801
    %999 = vmatmul.mubr.f32.gmra.mrb[0].mxu0 %v524
    %v1000 = vpop.f32.mrb[0].mxu0
    %v1001 = vadd.f32 %v680, %v1000
    %v1002 = vpop.f32.mrb[0].mxu0
    %1003 = vmatprep.mubr.f32.mxu0 %v804
    %1004 = vmatmul.mubr.f32.gmra.mrb[0].mxu0 %v526
    %v1005 = vpop.f32.mrb[0].mxu0
    %v1006 = vadd.f32 %v685, %v1005
    %v1007 = vpop.f32.mrb[0].mxu0
    %1008 = vmatprep.mubr.f32.mxu0 %v807
    %1009 = vmatmul.mubr.f32.gmra.mrb[0].mxu0 %v528
    %v1010 = vpop.f32.mrb[0].mxu0
    %v1011 = vadd.f32 %v690, %v1010
    %v1012 = vpop.f32.mrb[0].mxu0
    %1013 = vmatprep.mubr.f32.mxu0 %v810
    %1014 = vmatmul.mubr.f32.gmra.mrb[0].mxu0 %v530
    %v1015 = vpop.f32.mrb[0].mxu0
    %v1016 = vadd.f32 %v695, %v1015
    %v1017 = vpop.f32.mrb[0].mxu0
    %1018 = vmatprep.mubr.f32.mxu0 %v813
    %1019 = vmatmul.mubr.f32.gmra.mrb[0].mxu0 %v532
    %v1020 = vpop.f32.mrb[0].mxu0
    %v1021 = vadd.f32 %v700, %v1020
    %v1022 = vpop.f32.mrb[0].mxu0
    %1023 = vmatprep.mubr.f32.mxu0 %v816
    %1024 = vmatmul.mubr.f32.gmra.mrb[0].mxu0 %v534
    %v1025 = vpop.f32.mrb[0].mxu0
    %v1026 = vadd.f32 %v705, %v1025
    %v1027 = vpop.f32.mrb[0].mxu0
    %1028 = vmatprep.mubr.f32.mxu0 %v819
    %1029 = vmatmul.mubr.f32.gmra.mrb[0].mxu0 %v536
    %v1030 = vpop.f32.mrb[0].mxu0
    %v1031 = vadd.f32 %v710, %v1030
    %v1032 = vpop.f32.mrb[0].mxu0
    %1033 = vmatprep.mubr.f32.mxu0 %v822
    %1034 = vmatmul.mubr.f32.gmra.mrb[0].mxu0 %v538
    %v1035 = vpop.f32.mrb[0].mxu0
    %v1036 = vadd.f32 %v715, %v1035
    %v1037 = vpop.f32.mrb[0].mxu0
    %1038 = vmatprep.mubr.f32.mxu0 %v825
    %1039 = vmatmul.mubr.f32.gmra.mrb[0].mxu0 %v540
    %v1040 = vpop.f32.mrb[0].mxu0
    %v1041 = vadd.f32 %v720, %v1040
    %v1042 = vpop.f32.mrb[0].mxu0
    %1043 = vmatprep.mubr.f32.mxu0 %v828
    %1044 = vmatmul.mubr.f32.gmra.mrb[0].mxu0 %v542
    %v1045 = vpop.f32.mrb[0].mxu0
    %v1046 = vadd.f32 %v725, %v1045
    %v1047 = vpop.f32.mrb[0].mxu0
    %1048 = vmatprep.mubr.f32.mxu0 %v831
    %1049 = vmatmul.mubr.f32.gmra.mrb[0].mxu0 %v544
    %v1050 = vpop.f32.mrb[0].mxu0
    %v1051 = vadd.f32 %v730, %v1050
    %v1052 = vpop.f32.mrb[0].mxu0
    %1053 = vmatprep.mubr.f32.mxu0 %v834
    %1054 = vmatmul.mubr.f32.gmra.mrb[0].mxu0 %v546
    %v1055 = vpop.f32.mrb[0].mxu0
    %v1056 = vadd.f32 %v735, %v1055
    %v1057 = vpop.f32.mrb[0].mxu0
    %1058 = vmatprep.mubr.f32.mxu0 %v837
    %1059 = vmatmul.mubr.f32.gmra.mrb[0].mxu0 %v548
    %v1060 = vpop.f32.mrb[0].mxu0
    %v1061 = vadd.f32 %v740, %v1060
    %v1062 = vpop.f32.mrb[0].mxu0
    %1063 = vdwg.mxu0
    %v1064 = vmax.f32 %v906, 0.0
    %v1065 = vmax.f32 %v911, 0.0
    %v1066 = vmax.f32 %v916, 0.0
    %v1067 = vmax.f32 %v921, 0.0
    %v1068 = vmax.f32 %v926, 0.0
    %v1069 = vmax.f32 %v931, 0.0
    %v1070 = vmax.f32 %v936, 0.0
    %v1071 = vmax.f32 %v941, 0.0
    %v1072 = vmax.f32 %v946, 0.0
    %v1073 = vmax.f32 %v951, 0.0
    %v1074 = vmax.f32 %v956, 0.0
    %v1075 = vmax.f32 %v961, 0.0
    %v1076 = vmax.f32 %v966, 0.0
    %v1077 = vmax.f32 %v971, 0.0
    %v1078 = vmax.f32 %v976, 0.0
    %v1079 = vmax.f32 %v981, 0.0
    %v1080 = vmax.f32 %v986, 0.0
    %v1081 = vmax.f32 %v991, 0.0
    %v1082 = vmax.f32 %v996, 0.0
    %v1083 = vmax.f32 %v1001, 0.0
    %v1084 = vmax.f32 %v1006, 0.0
    %v1085 = vmax.f32 %v1011, 0.0
    %v1086 = vmax.f32 %v1016, 0.0
    %v1087 = vmax.f32 %v1021, 0.0
    %v1088 = vmax.f32 %v1026, 0.0
    %v1089 = vmax.f32 %v1031, 0.0
    %v1090 = vmax.f32 %v1036, 0.0
    %v1091 = vmax.f32 %v1041, 0.0
    %v1092 = vmax.f32 %v1046, 0.0
    %v1093 = vmax.f32 %v1051, 0.0
    %v1094 = vmax.f32 %v1056, 0.0
    %v1095 = vmax.f32 %v1061, 0.0
    %v1096 = vld [vmem:[%s5] sm:$0xff]
    %v1097 = vld [vmem:[%s5 + $0x8] sm:$0xff]
    %v1098 = vld [vmem:[%s5 + $0x10] sm:$0xff]
    %v1099 = vld [vmem:[%s5 + $0x18] sm:$0xff]
    %v1100 = vld [vmem:[%s5 + $0x20] sm:$0xff]
    %v1101 = vld [vmem:[%s5 + $0x28] sm:$0xff]
    %v1102 = vld [vmem:[%s5 + $0x30] sm:$0xff]
    %v1103 = vld [vmem:[%s5 + $0x38] sm:$0xff]
    %v1104 = vld [vmem:[%s5 + $0x40] sm:$0xff]
    %v1105 = vld [vmem:[%s5 + $0x48] sm:$0xff]
    %v1106 = vld [vmem:[%s5 + $0x50] sm:$0xff]
    %v1107 = vld [vmem:[%s5 + $0x58] sm:$0xff]
    %v1108 = vld [vmem:[%s5 + $0x60] sm:$0xff]
    %v1109 = vld [vmem:[%s5 + $0x68] sm:$0xff]
    %v1110 = vld [vmem:[%s5 + $0x70] sm:$0xff]
    %v1111 = vld [vmem:[%s5 + $0x78] sm:$0xff]
    %v1112 = vld [vmem:[%s5 + $0x80] sm:$0xff]
    %v1113 = vld [vmem:[%s5 + $0x88] sm:$0xff]
    %v1114 = vld [vmem:[%s5 + $0x90] sm:$0xff]
    %v1115 = vld [vmem:[%s5 + $0x98] sm:$0xff]
    %v1116 = vld [vmem:[%s5 + $0xa0] sm:$0xff]
    %v1117 = vld [vmem:[%s5 + $0xa8] sm:$0xff]
    %v1118 = vld [vmem:[%s5 + $0xb0] sm:$0xff]
    %v1119 = vld [vmem:[%s5 + $0xb8] sm:$0xff]
    %v1120 = vld [vmem:[%s5 + $0xc0] sm:$0xff]
    %v1121 = vld [vmem:[%s5 + $0xc8] sm:$0xff]
    %v1122 = vld [vmem:[%s5 + $0xd0] sm:$0xff]
    %v1123 = vld [vmem:[%s5 + $0xd8] sm:$0xff]
    %v1124 = vld [vmem:[%s5 + $0xe0] sm:$0xff]
    %v1125 = vld [vmem:[%s5 + $0xe8] sm:$0xff]
    %v1126 = vld [vmem:[%s5 + $0xf0] sm:$0xff]
    %v1127 = vld [vmem:[%s5 + $0xf8] sm:$0xff]
    %v1128 = vld [vmem:[%s6] sm:$0xff]
    %v1129 = vld [vmem:[%s6 + $0x8] sm:$0xff]
    %v1130 = vld [vmem:[%s6 + $0x10] sm:$0xff]
    %v1131 = vld [vmem:[%s6 + $0x18] sm:$0xff]
    %v1132 = vld [vmem:[%s6 + $0x20] sm:$0xff]
    %v1133 = vld [vmem:[%s6 + $0x28] sm:$0xff]
    %v1134 = vld [vmem:[%s6 + $0x30] sm:$0xff]
    %v1135 = vld [vmem:[%s6 + $0x38] sm:$0xff]
    %v1136 = vld [vmem:[%s6 + $0x40] sm:$0xff]
    %v1137 = vld [vmem:[%s6 + $0x48] sm:$0xff]
    %v1138 = vld [vmem:[%s6 + $0x50] sm:$0xff]
    %v1139 = vld [vmem:[%s6 + $0x58] sm:$0xff]
    %v1140 = vld [vmem:[%s6 + $0x60] sm:$0xff]
    %v1141 = vld [vmem:[%s6 + $0x68] sm:$0xff]
    %v1142 = vld [vmem:[%s6 + $0x70] sm:$0xff]
    %v1143 = vld [vmem:[%s6 + $0x78] sm:$0xff]
    %1145 = vset.pattern.permute.xlu0 0
    %1146 = vperm.xlu0 %1145, %v1128
    %v1147 = vpop.permute.xlu0 %1146
    %1150 = vset.pattern.permute.xlu0 0
    %1151 = vperm.xlu0 %1150, %v1129
    %v1152 = vpop.permute.xlu0 %1151
    %1155 = vset.pattern.permute.xlu0 0
    %1156 = vperm.xlu0 %1155, %v1130
    %v1157 = vpop.permute.xlu0 %1156
    %1160 = vset.pattern.permute.xlu0 0
    %1161 = vperm.xlu0 %1160, %v1131
    %v1162 = vpop.permute.xlu0 %1161
    %1165 = vset.pattern.permute.xlu0 0
    %1166 = vperm.xlu0 %1165, %v1132
    %v1167 = vpop.permute.xlu0 %1166
    %1170 = vset.pattern.permute.xlu0 0
    %1171 = vperm.xlu0 %1170, %v1133
    %v1172 = vpop.permute.xlu0 %1171
    %1175 = vset.pattern.permute.xlu0 0
    %1176 = vperm.xlu0 %1175, %v1134
    %v1177 = vpop.permute.xlu0 %1176
    %1180 = vset.pattern.permute.xlu0 0
    %1181 = vperm.xlu0 %1180, %v1135
    %v1182 = vpop.permute.xlu0 %1181
    %1185 = vset.pattern.permute.xlu0 0
    %1186 = vperm.xlu0 %1185, %v1136
    %v1187 = vpop.permute.xlu0 %1186
    %1190 = vset.pattern.permute.xlu0 0
    %1191 = vperm.xlu0 %1190, %v1137
    %v1192 = vpop.permute.xlu0 %1191
    %1195 = vset.pattern.permute.xlu0 0
    %1196 = vperm.xlu0 %1195, %v1138
    %v1197 = vpop.permute.xlu0 %1196
    %1200 = vset.pattern.permute.xlu0 0
    %1201 = vperm.xlu0 %1200, %v1139
    %v1202 = vpop.permute.xlu0 %1201
    %1205 = vset.pattern.permute.xlu0 0
    %1206 = vperm.xlu0 %1205, %v1140
    %v1207 = vpop.permute.xlu0 %1206
    %1210 = vset.pattern.permute.xlu0 0
    %1211 = vperm.xlu0 %1210, %v1141
    %v1212 = vpop.permute.xlu0 %1211
    %1215 = vset.pattern.permute.xlu0 0
    %1216 = vperm.xlu0 %1215, %v1142
    %v1217 = vpop.permute.xlu0 %1216
    %1220 = vset.pattern.permute.xlu0 0
    %1221 = vperm.xlu0 %1220, %v1143
    %v1222 = vpop.permute.xlu0 %1221
    %1224 = vmatprep.subr.mxu0 0.0
    %1225 = vmatpush1.msra.mxu0 %v1064
    %1226 = vmatprep.subr.mxu0 0.0
    %1227 = vmatpush1.msra.mxu0 %v1065
    %1228 = vmatprep.subr.mxu0 0.0
    %1229 = vmatpush1.msra.mxu0 %v1066
    %1230 = vmatprep.subr.mxu0 0.0
    %1231 = vmatpush1.msra.mxu0 %v1067
    %1232 = vmatprep.subr.mxu0 0.0
    %1233 = vmatpush1.msra.mxu0 %v1068
    %1234 = vmatprep.subr.mxu0 0.0
    %1235 = vmatpush1.msra.mxu0 %v1069
    %1236 = vmatprep.subr.mxu0 0.0
    %1237 = vmatpush1.msra.mxu0 %v1070
    %1238 = vmatprep.subr.mxu0 0.0
    %1239 = vmatpush1.msra.mxu0 %v1071
    %1240 = vmatprep.subr.mxu0 0.0
    %1241 = vmatpush1.msra.mxu0 %v1072
    %1242 = vmatprep.subr.mxu0 0.0
    %1243 = vmatpush1.msra.mxu0 %v1073
    %1244 = vmatprep.subr.mxu0 0.0
    %1245 = vmatpush1.msra.mxu0 %v1074
    %1246 = vmatprep.subr.mxu0 0.0
    %1247 = vmatpush1.msra.mxu0 %v1075
    %1248 = vmatprep.subr.mxu0 0.0
    %1249 = vmatpush1.msra.mxu0 %v1076
    %1250 = vmatprep.subr.mxu0 0.0
    %1251 = vmatpush1.msra.mxu0 %v1077
    %1252 = vmatprep.subr.mxu0 0.0
    %1253 = vmatpush1.msra.mxu0 %v1078
    %1254 = vmatprep.subr.mxu0 0.0
    %1255 = vmatpush1.msra.mxu0 %v1079
    %1256 = vmatprep.subr.mxu0 0.0
    %1257 = vmatpush1.msra.mxu0 %v1080
    %1258 = vmatprep.subr.mxu0 0.0
    %1259 = vmatpush1.msra.mxu0 %v1081
    %1260 = vmatprep.subr.mxu0 0.0
    %1261 = vmatpush1.msra.mxu0 %v1082
    %1262 = vmatprep.subr.mxu0 0.0
    %1263 = vmatpush1.msra.mxu0 %v1083
    %1264 = vmatprep.subr.mxu0 0.0
    %1265 = vmatpush1.msra.mxu0 %v1084
    %1266 = vmatprep.subr.mxu0 0.0
    %1267 = vmatpush1.msra.mxu0 %v1085
    %1268 = vmatprep.subr.mxu0 0.0
    %1269 = vmatpush1.msra.mxu0 %v1086
    %1270 = vmatprep.subr.mxu0 0.0
    %1271 = vmatpush1.msra.mxu0 %v1087
    %1272 = vmatprep.subr.mxu0 0.0
    %1273 = vmatpush1.msra.mxu0 %v1088
    %1274 = vmatprep.subr.mxu0 0.0
    %1275 = vmatpush1.msra.mxu0 %v1089
    %1276 = vmatprep.subr.mxu0 0.0
    %1277 = vmatpush1.msra.mxu0 %v1090
    %1278 = vmatprep.subr.mxu0 0.0
    %1279 = vmatpush1.msra.mxu0 %v1091
    %1280 = vmatprep.subr.mxu0 0.0
    %1281 = vmatpush1.msra.mxu0 %v1092
    %1282 = vmatprep.subr.mxu0 0.0
    %1283 = vmatpush1.msra.mxu0 %v1093
    %1284 = vmatprep.subr.mxu0 0.0
    %1285 = vmatpush1.msra.mxu0 %v1094
    %1286 = vmatprep.subr.mxu0 0.0
    %1287 = vmatpush1.msra.mxu0 %v1095
    %1288 = vmatprep.mubr.f32.mxu0 %v1097
    %1289 = vmatmul.mubr.f32.gmra.mrb[0].mxu0 %v1096
    %v1290 = vpop.f32.mrb[0].mxu0
    %v1291 = vadd.f32 %v1147, %v1290
    %v1292 = vpop.f32.mrb[0].mxu0
    %1293 = vmatprep.mubr.f32.mxu0 %v1099
    %1294 = vmatmul.mubr.f32.gmra.mrb[0].mxu0 %v1098
    %v1295 = vpop.f32.mrb[0].mxu0
    %v1296 = vadd.f32 %v1152, %v1295
    %v1297 = vpop.f32.mrb[0].mxu0
    %1298 = vmatprep.mubr.f32.mxu0 %v1101
    %1299 = vmatmul.mubr.f32.gmra.mrb[0].mxu0 %v1100
    %v1300 = vpop.f32.mrb[0].mxu0
    %v1301 = vadd.f32 %v1157, %v1300
    %v1302 = vpop.f32.mrb[0].mxu0
    %1303 = vmatprep.mubr.f32.mxu0 %v1103
    %1304 = vmatmul.mubr.f32.gmra.mrb[0].mxu0 %v1102
    %v1305 = vpop.f32.mrb[0].mxu0
    %v1306 = vadd.f32 %v1162, %v1305
    %v1307 = vpop.f32.mrb[0].mxu0
    %1308 = vmatprep.mubr.f32.mxu0 %v1105
    %1309 = vmatmul.mubr.f32.gmra.mrb[0].mxu0 %v1104
    %v1310 = vpop.f32.mrb[0].mxu0
    %v1311 = vadd.f32 %v1167, %v1310
    %v1312 = vpop.f32.mrb[0].mxu0
    %1313 = vmatprep.mubr.f32.mxu0 %v1107
    %1314 = vmatmul.mubr.f32.gmra.mrb[0].mxu0 %v1106
    %v1315 = vpop.f32.mrb[0].mxu0
    %v1316 = vadd.f32 %v1172, %v1315
    %v1317 = vpop.f32.mrb[0].mxu0
    %1318 = vmatprep.mubr.f32.mxu0 %v1109
    %1319 = vmatmul.mubr.f32.gmra.mrb[0].mxu0 %v1108
    %v1320 = vpop.f32.mrb[0].mxu0
    %v1321 = vadd.f32 %v1177, %v1320
    %v1322 = vpop.f32.mrb[0].mxu0
    %1323 = vmatprep.mubr.f32.mxu0 %v1111
    %1324 = vmatmul.mubr.f32.gmra.mrb[0].mxu0 %v1110
    %v1325 = vpop.f32.mrb[0].mxu0
    %v1326 = vadd.f32 %v1182, %v1325
    %v1327 = vpop.f32.mrb[0].mxu0
    %1328 = vmatprep.mubr.f32.mxu0 %v1113
    %1329 = vmatmul.mubr.f32.gmra.mrb[0].mxu0 %v1112
    %v1330 = vpop.f32.mrb[0].mxu0
    %v1331 = vadd.f32 %v1187, %v1330
    %v1332 = vpop.f32.mrb[0].mxu0
    %1333 = vmatprep.mubr.f32.mxu0 %v1115
    %1334 = vmatmul.mubr.f32.gmra.mrb[0].mxu0 %v1114
    %v1335 = vpop.f32.mrb[0].mxu0
    %v1336 = vadd.f32 %v1192, %v1335
    %v1337 = vpop.f32.mrb[0].mxu0
    %1338 = vmatprep.mubr.f32.mxu0 %v1117
    %1339 = vmatmul.mubr.f32.gmra.mrb[0].mxu0 %v1116
    %v1340 = vpop.f32.mrb[0].mxu0
    %v1341 = vadd.f32 %v1197, %v1340
    %v1342 = vpop.f32.mrb[0].mxu0
    %1343 = vmatprep.mubr.f32.mxu0 %v1119
    %1344 = vmatmul.mubr.f32.gmra.mrb[0].mxu0 %v1118
    %v1345 = vpop.f32.mrb[0].mxu0
    %v1346 = vadd.f32 %v1202, %v1345
    %v1347 = vpop.f32.mrb[0].mxu0
    %1348 = vmatprep.mubr.f32.mxu0 %v1121
    %1349 = vmatmul.mubr.f32.gmra.mrb[0].mxu0 %v1120
    %v1350 = vpop.f32.mrb[0].mxu0
    %v1351 = vadd.f32 %v1207, %v1350
    %v1352 = vpop.f32.mrb[0].mxu0
    %1353 = vmatprep.mubr.f32.mxu0 %v1123
    %1354 = vmatmul.mubr.f32.gmra.mrb[0].mxu0 %v1122
    %v1355 = vpop.f32.mrb[0].mxu0
    %v1356 = vadd.f32 %v1212, %v1355
    %v1357 = vpop.f32.mrb[0].mxu0
    %1358 = vmatprep.mubr.f32.mxu0 %v1125
    %1359 = vmatmul.mubr.f32.gmra.mrb[0].mxu0 %v1124
    %v1360 = vpop.f32.mrb[0].mxu0
    %v1361 = vadd.f32 %v1217, %v1360
    %v1362 = vpop.f32.mrb[0].mxu0
    %1363 = vmatprep.mubr.f32.mxu0 %v1127
    %1364 = vmatmul.mubr.f32.gmra.mrb[0].mxu0 %v1126
    %v1365 = vpop.f32.mrb[0].mxu0
    %v1366 = vadd.f32 %v1222, %v1365
    %v1367 = vpop.f32.mrb[0].mxu0
    %1368 = vdwg.mxu0
    %v1369 = vmax.f32 %v1291, 0.0
    %v1370 = vmax.f32 %v1296, 0.0
    %v1371 = vmax.f32 %v1301, 0.0
    %v1372 = vmax.f32 %v1306, 0.0
    %v1373 = vmax.f32 %v1311, 0.0
    %v1374 = vmax.f32 %v1316, 0.0
    %v1375 = vmax.f32 %v1321, 0.0
    %v1376 = vmax.f32 %v1326, 0.0
    %v1377 = vmax.f32 %v1331, 0.0
    %v1378 = vmax.f32 %v1336, 0.0
    %v1379 = vmax.f32 %v1341, 0.0
    %v1380 = vmax.f32 %v1346, 0.0
    %v1381 = vmax.f32 %v1351, 0.0
    %v1382 = vmax.f32 %v1356, 0.0
    %v1383 = vmax.f32 %v1361, 0.0
    %v1384 = vmax.f32 %v1366, 0.0
    %v1385 = vld [vmem:[%s7] sm:$0xff]
    %v1386 = vld [vmem:[%s7 + $0x8] sm:$0xff]
    %v1387 = vld [vmem:[%s7 + $0x10] sm:$0xff]
    %v1388 = vld [vmem:[%s7 + $0x18] sm:$0xff]
    %v1389 = vld [vmem:[%s7 + $0x20] sm:$0xff]
    %v1390 = vld [vmem:[%s7 + $0x28] sm:$0xff]
    %v1391 = vld [vmem:[%s7 + $0x30] sm:$0xff]
    %v1392 = vld [vmem:[%s7 + $0x38] sm:$0xff]
    %v1393 = vld [vmem:[%s7 + $0x40] sm:$0xff]
    %v1394 = vld [vmem:[%s7 + $0x48] sm:$0xff]
    %v1395 = vld [vmem:[%s7 + $0x50] sm:$0xff]
    %v1396 = vld [vmem:[%s7 + $0x58] sm:$0xff]
    %v1397 = vld [vmem:[%s7 + $0x60] sm:$0xff]
    %v1398 = vld [vmem:[%s7 + $0x68] sm:$0xff]
    %v1399 = vld [vmem:[%s7 + $0x70] sm:$0xff]
    %v1400 = vld [vmem:[%s7 + $0x78] sm:$0xff]
    %1402 = vset.pattern.permute.xlu0 0
    %1403 = vperm.xlu0 %1402, %v1385
    %v1404 = vpop.permute.xlu0 %1403
    %1407 = vset.pattern.permute.xlu0 0
    %1408 = vperm.xlu0 %1407, %v1386
    %v1409 = vpop.permute.xlu0 %1408
    %1412 = vset.pattern.permute.xlu0 0
    %1413 = vperm.xlu0 %1412, %v1387
    %v1414 = vpop.permute.xlu0 %1413
    %1417 = vset.pattern.permute.xlu0 0
    %1418 = vperm.xlu0 %1417, %v1388
    %v1419 = vpop.permute.xlu0 %1418
    %1422 = vset.pattern.permute.xlu0 0
    %1423 = vperm.xlu0 %1422, %v1389
    %v1424 = vpop.permute.xlu0 %1423
    %1427 = vset.pattern.permute.xlu0 0
    %1428 = vperm.xlu0 %1427, %v1390
    %v1429 = vpop.permute.xlu0 %1428
    %1432 = vset.pattern.permute.xlu0 0
    %1433 = vperm.xlu0 %1432, %v1391
    %v1434 = vpop.permute.xlu0 %1433
    %1437 = vset.pattern.permute.xlu0 0
    %1438 = vperm.xlu0 %1437, %v1392
    %v1439 = vpop.permute.xlu0 %1438
    %1442 = vset.pattern.permute.xlu0 0
    %1443 = vperm.xlu0 %1442, %v1393
    %v1444 = vpop.permute.xlu0 %1443
    %1447 = vset.pattern.permute.xlu0 0
    %1448 = vperm.xlu0 %1447, %v1394
    %v1449 = vpop.permute.xlu0 %1448
    %1452 = vset.pattern.permute.xlu0 0
    %1453 = vperm.xlu0 %1452, %v1395
    %v1454 = vpop.permute.xlu0 %1453
    %1457 = vset.pattern.permute.xlu0 0
    %1458 = vperm.xlu0 %1457, %v1396
    %v1459 = vpop.permute.xlu0 %1458
    %1462 = vset.pattern.permute.xlu0 0
    %1463 = vperm.xlu0 %1462, %v1397
    %v1464 = vpop.permute.xlu0 %1463
    %1467 = vset.pattern.permute.xlu0 0
    %1468 = vperm.xlu0 %1467, %v1398
    %v1469 = vpop.permute.xlu0 %1468
    %1472 = vset.pattern.permute.xlu0 0
    %1473 = vperm.xlu0 %1472, %v1399
    %v1474 = vpop.permute.xlu0 %1473
    %1477 = vset.pattern.permute.xlu0 0
    %1478 = vperm.xlu0 %1477, %v1400
    %v1479 = vpop.permute.xlu0 %1478
    %v1481 = vmul.f32 %v1369, %v1404
    %v1482 = vmul.f32 %v1370, %v1409
    %v1483 = vmul.f32 %v1371, %v1414
    %v1484 = vmul.f32 %v1372, %v1419
    %v1485 = vmul.f32 %v1373, %v1424
    %v1486 = vmul.f32 %v1374, %v1429
    %v1487 = vmul.f32 %v1375, %v1434
    %v1488 = vmul.f32 %v1376, %v1439
    %v1489 = vmul.f32 %v1377, %v1444
    %v1490 = vmul.f32 %v1378, %v1449
    %v1491 = vmul.f32 %v1379, %v1454
    %v1492 = vmul.f32 %v1380, %v1459
    %v1493 = vmul.f32 %v1381, %v1464
    %v1494 = vmul.f32 %v1382, %v1469
    %v1495 = vmul.f32 %v1383, %v1474
    %v1496 = vmul.f32 %v1384, %v1479
    %v1497 = vadd.f32 %v1481, %v1482
    %v1498 = vadd.f32 %v1497, %v1483
    %v1499 = vadd.f32 %v1498, %v1484
    %v1500 = vadd.f32 %v1499, %v1485
    %v1501 = vadd.f32 %v1500, %v1486
    %v1502 = vadd.f32 %v1501, %v1487
    %v1503 = vadd.f32 %v1502, %v1488
    %v1504 = vadd.f32 %v1503, %v1489
    %v1505 = vadd.f32 %v1504, %v1490
    %v1506 = vadd.f32 %v1505, %v1491
    %v1507 = vadd.f32 %v1506, %v1492
    %v1508 = vadd.f32 %v1507, %v1493
    %v1509 = vadd.f32 %v1508, %v1494
    %v1510 = vadd.f32 %v1509, %v1495
    %v1511 = vadd.f32 %v1510, %v1496
    %v1512 = vrot.slane %v1511, 4
    %v1513 = vadd.f32 %v1511, %v1512
    %v1514 = vrot.slane %v1513, 2
    %v1515 = vadd.f32 %v1513, %v1514
    %v1516 = vrot.slane %v1515, 1
    %v1517 = vadd.f32 %v1515, %v1516
    %v1518 = vld [vmem:[#allocation2] sm:$0x1]
    %1520 = vset.pattern.permute.xlu0 0
    %1521 = vperm.xlu0 %1520, %v1518
    %v1522 = vpop.permute.xlu0 %1521
    %v1524 = vlaneseq
    %v1525 = vshrl.u32 %v1524, 7
    %v1526 = vsub.s32 0, %v1525
    %v1527 = vrot.slane %v1522, %v1526
    %v1528 = vadd.f32 %v1517, %v1527
    %1529 = vst [vmem:[#allocation3] sm:$0x1] %v1528
    // Predicated region
    $region38: #{tpu_custom_call.1} parent=1 // pred_check
      _
    $region39: #{tpu_custom_call.1} parent=1 // pred_check_branch
      %1531 = sbr.rel (0) target = $region41
    $region40: #{tpu_custom_call.1} parent=1 // pred_region
      %s1533 = ssub.s32 16, 16
      %1534 = vsyncadd [#allocation4], %s1533
      %s1536 = sshll.u32 [#allocation3], 4
      %s1537 = int_to_ptr.vmem [resolvable:$true] %s1536
      %1539 = dma.vmem_to_hbm [thread:$0]  %s1537, 16, %s9, [#allocation4]
    $region41: #{tpu_custom_call.1} parent=1 // pred_fallthru
      _
    // Predicated region
    $region42: #{tpu_custom_call.1} parent=1 // pred_check
      _
    $region43: #{tpu_custom_call.1} parent=1 // pred_check_branch
      %1541 = sbr.rel (0) target = $region45
    $region44: #{tpu_custom_call.1} parent=1 // pred_region
      %1542 = dma.done [#allocation4], 16
    $region45: #{tpu_custom_call.1} parent=1 // pred_fallthru
      _
    %1543 = vsyncpa [#allocation4], 1

</llo_original>
